<compile_context>
chip_gen: v6e
topology: v6e:2x2x1
jax: 0.10.0
libtpu: 0.0.40
codegen_flags: <defaults>
</compile_context>

<pallas_src>
import functools

import jax
import jax.numpy as jnp
from jax import lax
from jax.experimental import pallas as pl
from jax.experimental.pallas import tpu as pltpu

EPS = 1e-5  # torch.nn.LayerNorm default


def _silu(v):
    return v * jax.nn.sigmoid(v)


def _layer_norm(v, gamma, beta):
    mean = jnp.mean(v, axis=-1, keepdims=True)
    var = jnp.mean((v - mean) ** 2, axis=-1, keepdims=True)
    return (v - mean) * lax.rsqrt(var + EPS) * gamma + beta


def _mm(a_f32, w_bf16):
    """MXU matmul: bf16 operands, f32 accumulation."""
    return jnp.dot(a_f32.astype(jnp.bfloat16), w_bf16,
                   preferred_element_type=jnp.float32)


# --------------------------------------------------------------------------
# Kernel 1: edge MLP + scatter-sum aggregation, tiled over edge blocks.
# --------------------------------------------------------------------------
def edge_kernel(src_ref, dst_ref,                       # SMEM (scalar prefetch)
                x_ref, ea_ref,
                w1e_i_ref, w1e_j_ref, w1e_e_ref, b1e_ref,
                w2e_ref, b2e_ref, ge_ref, be_ref,
                edges_out_ref, agg_ref,
                xi_buf, xj_buf,
                *, n_edges_real, tile_e):
    t = pl.program_id(0)

    @pl.when(t == 0)
    def _():
        agg_ref[...] = jnp.zeros_like(agg_ref)

    # --- gather x_i = x[dst], x_j = x[src] : O(tile_e * C) row copies ---------
    def gather(i, carry):
        e = t * tile_e + i
        s = src_ref[e]
        d = dst_ref[e]
        xj_buf[pl.ds(i, 1), :] = x_ref[pl.ds(s, 1), :]
        xi_buf[pl.ds(i, 1), :] = x_ref[pl.ds(d, 1), :]
        return carry

    lax.fori_loop(0, tile_e, gather, 0)

    x_i = xi_buf[...]
    x_j = xj_buf[...]
    ea = ea_ref[...]

    # --- edge MLP: Linear(3C->H) as 3 partial matmuls (== concat @ W) --------
    h = (_mm(x_i, w1e_i_ref[...]) + _mm(x_j, w1e_j_ref[...])
         + _mm(ea, w1e_e_ref[...]) + b1e_ref[...])
    h = _silu(h)
    h = _mm(h, w2e_ref[...]) + b2e_ref[...]
    h = _layer_norm(h, ge_ref[...], be_ref[...])
    edges_out_ref[...] = h + ea                                    # edges_new tile

    # --- scatter-sum into agg accumulator (sequential => duplicates exact) ---
    def scatter(i, carry):
        e = t * tile_e + i
        d = dst_ref[e]

        @pl.when(e < n_edges_real)                                 # skip pad edges
        def _():
            agg_ref[pl.ds(d, 1), :] = (agg_ref[pl.ds(d, 1), :]
                                       + edges_out_ref[pl.ds(i, 1), :])
        return carry

    lax.fori_loop(0, tile_e, scatter, 0)


# --------------------------------------------------------------------------
# Kernel 2: node MLP + residual, tiled over node blocks (fully parallel).
# --------------------------------------------------------------------------
def node_kernel(x_ref, agg_ref,
                w1n_x_ref, w1n_a_ref, b1n_ref, w2n_ref, b2n_ref, gn_ref, bn_ref,
                nodes_out_ref):
    x = x_ref[...]
    agg = agg_ref[...]
    g = _mm(x, w1n_x_ref[...]) + _mm(agg, w1n_a_ref[...]) + b1n_ref[...]
    g = _silu(g)
    g = _mm(g, w2n_ref[...]) + b2n_ref[...]
    g = _layer_norm(g, gn_ref[...], bn_ref[...])
    nodes_out_ref[...] = g + x


def graphconv_block(x, edge_attr, edge_index, params, *, tile_e=128, tile_n=128):
    """x: [N, C] f32, edge_attr: [E, C] f32, edge_index: [2, E] int32."""
    n_nodes, c = x.shape
    n_edges = edge_attr.shape[0]

    (w1e_i, w1e_j, w1e_e, b1e, w2e, b2e, ge, be,
     w1n_x, w1n_a, b1n, w2n, b2n, gn, bn) = params

    # pad nodes / edges up to tile multiples (pad edges are masked in-kernel)
    n_pad = ((n_nodes + tile_n - 1) // tile_n) * tile_n
    e_pad = ((n_edges + tile_e - 1) // tile_e) * tile_e
    x_p = jnp.pad(x, ((0, n_pad - n_nodes), (0, 0)))
    ea_p = jnp.pad(edge_attr, ((0, e_pad - n_edges), (0, 0)))
    src = jnp.pad(edge_index[0].astype(jnp.int32), (0, e_pad - n_edges))
    dst = jnp.pad(edge_index[1].astype(jnp.int32), (0, e_pad - n_edges))

    bf = lambda w: w.astype(jnp.bfloat16)    # weights -> bf16 MXU operands

    # ----------------------- edge phase -----------------------
    # TODO(synk): x is held fully VMEM-resident for the in-kernel gather; for
    # anemoi-scale node counts this should become an HBM-side DMA gather.
    edge_fn = functools.partial(edge_kernel, n_edges_real=n_edges, tile_e=tile_e)
    edges_new_p, agg = pl.pallas_call(
        edge_fn,
        out_shape=(
            jax.ShapeDtypeStruct((e_pad, c), jnp.float32),   # edges_new
            jax.ShapeDtypeStruct((n_pad, c), jnp.float32),   # agg (scatter-sum)
        ),
        grid_spec=pltpu.PrefetchScalarGridSpec(
            num_scalar_prefetch=2,                            # src, dst -> SMEM
            grid=(e_pad // tile_e,),
            in_specs=[
                pl.BlockSpec((n_pad, c), lambda t, *_: (0, 0)),   # x (resident)
                pl.BlockSpec((tile_e, c), lambda t, *_: (t, 0)),  # edge_attr tile
                pl.BlockSpec((c, c), lambda t, *_: (0, 0)),       # w1e_i
                pl.BlockSpec((c, c), lambda t, *_: (0, 0)),       # w1e_j
                pl.BlockSpec((c, c), lambda t, *_: (0, 0)),       # w1e_e
                pl.BlockSpec((1, c), lambda t, *_: (0, 0)),       # b1e
                pl.BlockSpec((c, c), lambda t, *_: (0, 0)),       # w2e
                pl.BlockSpec((1, c), lambda t, *_: (0, 0)),       # b2e
                pl.BlockSpec((1, c), lambda t, *_: (0, 0)),       # gamma (edge LN)
                pl.BlockSpec((1, c), lambda t, *_: (0, 0)),       # beta  (edge LN)
            ],
            out_specs=(
                pl.BlockSpec((tile_e, c), lambda t, *_: (t, 0)),  # edges_new tile
                pl.BlockSpec((n_pad, c), lambda t, *_: (0, 0)),   # agg accumulator
            ),
            scratch_shapes=[
                pltpu.VMEM((tile_e, c), jnp.float32),             # x_i tile
                pltpu.VMEM((tile_e, c), jnp.float32),             # x_j tile
            ],
        ),
        compiler_params=pltpu.CompilerParams(
            dimension_semantics=("arbitrary",),        # agg accumulates across tiles
            vmem_limit_bytes=64 * 1024 * 1024),
    )(src, dst, x_p, ea_p,
      bf(w1e_i), bf(w1e_j), bf(w1e_e), b1e, bf(w2e), b2e, ge, be)

    # ----------------------- node phase -----------------------
    nodes_new_p = pl.pallas_call(
        node_kernel,
        out_shape=jax.ShapeDtypeStruct((n_pad, c), jnp.float32),
        grid=(n_pad // tile_n,),
        in_specs=[
            pl.BlockSpec((tile_n, c), lambda i: (i, 0)),          # x tile
            pl.BlockSpec((tile_n, c), lambda i: (i, 0)),          # agg tile
            pl.BlockSpec((c, c), lambda i: (0, 0)),               # w1n_x
            pl.BlockSpec((c, c), lambda i: (0, 0)),               # w1n_a
            pl.BlockSpec((1, c), lambda i: (0, 0)),               # b1n
            pl.BlockSpec((c, c), lambda i: (0, 0)),               # w2n
            pl.BlockSpec((1, c), lambda i: (0, 0)),               # b2n
            pl.BlockSpec((1, c), lambda i: (0, 0)),               # gamma (node LN)
            pl.BlockSpec((1, c), lambda i: (0, 0)),               # beta  (node LN)
        ],
        out_specs=pl.BlockSpec((tile_n, c), lambda i: (i, 0)),
        compiler_params=pltpu.CompilerParams(
            dimension_semantics=("parallel",),
            vmem_limit_bytes=64 * 1024 * 1024),
    )(x_p, agg, bf(w1n_x), bf(w1n_a), b1n, bf(w2n), b2n, gn, bn)

    return nodes_new_p[:n_nodes], edges_new_p[:n_edges]


def init_params(key, c_in, c_out):
    ks = jax.random.split(key, 8)

    def lin(k, fi, fo):
        return (jax.random.normal(k, (fi, fo), jnp.float32) / jnp.sqrt(float(fi)))

    # edge MLP: Linear(3*C_in -> C_out), SiLU, Linear(C_out -> C_out), LayerNorm
    w1e = lin(ks[0], 3 * c_in, c_out)
    w1e_i, w1e_j, w1e_e = w1e[:c_in], w1e[c_in:2 * c_in], w1e[2 * c_in:]
    b1e = 0.01 * jax.random.normal(ks[1], (1, c_out), jnp.float32)
    w2e = lin(ks[2], c_out, c_out)
    b2e = 0.01 * jax.random.normal(ks[3], (1, c_out), jnp.float32)
    ge, be = jnp.ones((1, c_out), jnp.float32), jnp.zeros((1, c_out), jnp.float32)

    # node MLP: Linear(2*C_in -> C_out), SiLU, Linear(C_out -> C_out), LayerNorm
    w1n = lin(ks[4], 2 * c_in, c_out)
    w1n_x, w1n_a = w1n[:c_in], w1n[c_in:]
    b1n = 0.01 * jax.random.normal(ks[5], (1, c_out), jnp.float32)
    w2n = lin(ks[6], c_out, c_out)
    b2n = 0.01 * jax.random.normal(ks[7], (1, c_out), jnp.float32)
    gn, bn = jnp.ones((1, c_out), jnp.float32), jnp.zeros((1, c_out), jnp.float32)

    return (w1e_i, w1e_j, w1e_e, b1e, w2e, b2e, ge, be,
            w1n_x, w1n_a, b1n, w2n, b2n, gn, bn)


def reference(x, edge_attr, edge_index, params):
    """Pure-JAX reference mirroring the PyTorch forward (bf16 matmul operands,
    f32 accumulation/elementwise — same dtype policy as the kernel)."""
    (w1e_i, w1e_j, w1e_e, b1e, w2e, b2e, ge, be,
     w1n_x, w1n_a, b1n, w2n, b2n, gn, bn) = params

    def mm(a, w):
        return jnp.dot(a.astype(jnp.bfloat16), w.astype(jnp.bfloat16),
                       preferred_element_type=jnp.float32)

    src, dst = edge_index[0], edge_index[1]
    x_i, x_j = x[dst], x[src]
    h = mm(x_i, w1e_i) + mm(x_j, w1e_j) + mm(edge_attr, w1e_e) + b1e
    h = _silu(h)
    h = mm(h, w2e) + b2e
    h = _layer_norm(h, ge, be)
    edges_new = h + edge_attr
    agg = jax.ops.segment_sum(edges_new, dst, num_segments=x.shape[0])
    g = mm(x, w1n_x) + mm(agg, w1n_a) + b1n
    g = _silu(g)
    g = mm(g, w2n) + b2n
    g = _layer_norm(g, gn, bn)
    return g + x, edges_new


if __name__ == "__main__":
    # lane-dense feature dim (multiple of 128) per the performance review
    N, E, C = 256, 512, 128   # nodes, edges, in_channels == out_channels
    key = jax.random.PRNGKey(0)
    kx, ke, ki, kp = jax.random.split(key, 4)

    x = jax.random.normal(kx, (N, C), jnp.float32)
    edge_attr = jax.random.normal(ke, (E, C), jnp.float32)
    edge_index = jax.random.randint(ki, (2, E), 0, N, jnp.int32)
    params = init_params(kp, C, C)

    nodes_new, edges_new = graphconv_block(x, edge_attr, edge_index, params)
    jax.block_until_ready((nodes_new, edges_new))

    nodes_ref, edges_ref = reference(x, edge_attr, edge_index, params)
    assert jnp.all(jnp.isfinite(nodes_new)) and jnp.all(jnp.isfinite(edges_new))
    assert jnp.allclose(edges_new, edges_ref, atol=1e-2, rtol=1e-2), "edge mismatch"
    assert jnp.allclose(nodes_new, nodes_ref, atol=1e-2, rtol=1e-2), "node mismatch"

    # TODO(synk): model_comm_group sync/shard (distributed sharding) has no
    # single-chip Pallas equivalent; num_chunks>1 chunking is omitted
    # (single-chunk result is mathematically identical).
    print("KERNEL_OK")
</pallas_src>

<mosaic_0001>
module attributes {stable_mosaic.version = 11 : i64} {
  func.func @edge_kernel(%arg0: i32, %arg1: memref<512xi32, #tpu.memory_space<smem>>, %arg2: memref<512xi32, #tpu.memory_space<smem>>, %arg3: memref<256x128xf32, #tpu.memory_space<vmem>>, %arg4: memref<128x128xf32, #tpu.memory_space<vmem>>, %arg5: memref<128x128xbf16, #tpu.memory_space<vmem>>, %arg6: memref<128x128xbf16, #tpu.memory_space<vmem>>, %arg7: memref<128x128xbf16, #tpu.memory_space<vmem>>, %arg8: memref<1x128xf32, #tpu.memory_space<vmem>>, %arg9: memref<128x128xbf16, #tpu.memory_space<vmem>>, %arg10: memref<1x128xf32, #tpu.memory_space<vmem>>, %arg11: memref<1x128xf32, #tpu.memory_space<vmem>>, %arg12: memref<1x128xf32, #tpu.memory_space<vmem>>, %arg13: memref<128x128xf32, #tpu.memory_space<vmem>>, %arg14: memref<256x128xf32, #tpu.memory_space<vmem>>, %arg15: memref<128x128xf32, #tpu.memory_space<vmem>>, %arg16: memref<128x128xf32, #tpu.memory_space<vmem>>) attributes {dimension_semantics = [#tpu.dimension_semantics<arbitrary>], iteration_bounds = array<i64: 4>, scalar_prefetch = 2 : i64, scratch_operands = 2 : i64, tpu.core_type = #tpu.core_type<tc>, window_params = [{pipeline_mode = #tpu.pipeline_mode<synchronous>, transform_indices = @transform_0, window_bounds = array<i64: 256, 128>}, {transform_indices = @transform_1, window_bounds = array<i64: 128, 128>}, {pipeline_mode = #tpu.pipeline_mode<synchronous>, transform_indices = @transform_2, window_bounds = array<i64: 128, 128>}, {pipeline_mode = #tpu.pipeline_mode<synchronous>, transform_indices = @transform_3, window_bounds = array<i64: 128, 128>}, {pipeline_mode = #tpu.pipeline_mode<synchronous>, transform_indices = @transform_4, window_bounds = array<i64: 128, 128>}, {pipeline_mode = #tpu.pipeline_mode<synchronous>, transform_indices = @transform_5, window_bounds = array<i64: 1, 128>}, {pipeline_mode = #tpu.pipeline_mode<synchronous>, transform_indices = @transform_6, window_bounds = array<i64: 128, 128>}, {pipeline_mode = #tpu.pipeline_mode<synchronous>, transform_indices = @transform_7, window_bounds = array<i64: 1, 128>}, {pipeline_mode = #tpu.pipeline_mode<synchronous>, transform_indices = @transform_8, window_bounds = array<i64: 1, 128>}, {pipeline_mode = #tpu.pipeline_mode<synchronous>, transform_indices = @transform_9, window_bounds = array<i64: 1, 128>}, {transform_indices = @transform_10, window_bounds = array<i64: 128, 128>}, {pipeline_mode = #tpu.pipeline_mode<synchronous>, transform_indices = @transform_11, window_bounds = array<i64: 256, 128>}]} {
    %c0_i32 = arith.constant 0 : i32
    %0 = arith.cmpi eq, %arg0, %c0_i32 : i32
    %1 = arith.extui %0 : i1 to i32
    %c0_i32_0 = arith.constant 0 : i32
    %2 = arith.cmpi ne, %1, %c0_i32_0 : i32
    scf.if %2 {
      %cst_39 = arith.constant 0.000000e+00 : f32
      %60 = vector.broadcast %cst_39 : f32 to vector<256x128xf32>
      %c0_40 = arith.constant 0 : index
      %c0_41 = arith.constant 0 : index
      %61 = vector.load %arg14[%c0_40, %c0_41] : memref<256x128xf32, #tpu.memory_space<vmem>>, vector<256x128xf32>
      tpu.vector_store %arg14[%c0_40, %c0_41], %60 {strides = array<i32>} : memref<256x128xf32, #tpu.memory_space<vmem>>, vector<256x128xf32>,
    } else {
    }
    %c0_i32_1 = arith.constant 0 : i32
    %c128_i32 = arith.constant 128 : i32
    %3 = arith.addi %c0_i32_1, %c128_i32 : i32
    %c1_i32 = arith.constant 1 : i32
    scf.for %arg17 = %c0_i32_1 to %3 step %c1_i32  : i32 {
      %c128_i32_39 = arith.constant 128 : i32
      %60 = arith.muli %arg0, %c128_i32_39 : i32
      %61 = arith.addi %60, %arg17 : i32
      %62 = arith.index_cast %61 : i32 to index
      %63 = memref.load %arg1[%62] : memref<512xi32, #tpu.memory_space<smem>>
      %64 = arith.index_cast %61 : i32 to index
      %65 = memref.load %arg2[%64] : memref<512xi32, #tpu.memory_space<smem>>
      %66 = arith.index_cast %63 : i32 to index
      %c0_40 = arith.constant 0 : index
      %67 = vector.load %arg3[%66, %c0_40] : memref<256x128xf32, #tpu.memory_space<vmem>>, vector<1x128xf32>
      %68 = arith.index_cast %arg17 : i32 to index
      %c0_41 = arith.constant 0 : index
      %69 = vector.load %arg16[%68, %c0_41] : memref<128x128xf32, #tpu.memory_space<vmem>>, vector<1x128xf32>
      tpu.vector_store %arg16[%68, %c0_41], %67 {strides = array<i32>} : memref<128x128xf32, #tpu.memory_space<vmem>>, vector<1x128xf32>,
      %70 = arith.index_cast %65 : i32 to index
      %c0_42 = arith.constant 0 : index
      %71 = vector.load %arg3[%70, %c0_42] : memref<256x128xf32, #tpu.memory_space<vmem>>, vector<1x128xf32>
      %72 = arith.index_cast %arg17 : i32 to index
      %c0_43 = arith.constant 0 : index
      %73 = vector.load %arg15[%72, %c0_43] : memref<128x128xf32, #tpu.memory_space<vmem>>, vector<1x128xf32>
      tpu.vector_store %arg15[%72, %c0_43], %71 {strides = array<i32>} : memref<128x128xf32, #tpu.memory_space<vmem>>, vector<1x128xf32>,
    }
    %c128_i32_2 = arith.constant 128 : i32
    %c0 = arith.constant 0 : index
    %c0_3 = arith.constant 0 : index
    %4 = vector.load %arg15[%c0, %c0_3] : memref<128x128xf32, #tpu.memory_space<vmem>>, vector<128x128xf32>
    %c0_4 = arith.constant 0 : index
    %c0_5 = arith.constant 0 : index
    %5 = vector.load %arg16[%c0_4, %c0_5] : memref<128x128xf32, #tpu.memory_space<vmem>>, vector<128x128xf32>
    %c0_6 = arith.constant 0 : index
    %c0_7 = arith.constant 0 : index
    %6 = vector.load %arg4[%c0_6, %c0_7] : memref<128x128xf32, #tpu.memory_space<vmem>>, vector<128x128xf32>
    %c0_8 = arith.constant 0 : index
    %c0_9 = arith.constant 0 : index
    %7 = vector.load %arg5[%c0_8, %c0_9] : memref<128x128xbf16, #tpu.memory_space<vmem>>, vector<128x128xbf16>
    %8 = arith.truncf %4 : vector<128x128xf32> to vector<128x128xbf16>
    %cst = arith.constant dense<0.000000e+00> : vector<128x128xf32>
    %9 = tpu.matmul %8, %7, %cst {dimension_numbers = #tpu.dot_dimension_numbers<[1], [0], [0], [1], [0, 0, 1, 1], [], []>} : vector<128x128xbf16>, vector<128x128xbf16>, vector<128x128xf32> -> vector<128x128xf32>
    %c0_10 = arith.constant 0 : index
    %c0_11 = arith.constant 0 : index
    %10 = vector.load %arg6[%c0_10, %c0_11] : memref<128x128xbf16, #tpu.memory_space<vmem>>, vector<128x128xbf16>
    %11 = arith.truncf %5 : vector<128x128xf32> to vector<128x128xbf16>
    %cst_12 = arith.constant dense<0.000000e+00> : vector<128x128xf32>
    %12 = tpu.matmul %11, %10, %cst_12 {dimension_numbers = #tpu.dot_dimension_numbers<[1], [0], [0], [1], [0, 0, 1, 1], [], []>} : vector<128x128xbf16>, vector<128x128xbf16>, vector<128x128xf32> -> vector<128x128xf32>
    %13 = arith.addf %9, %12 : vector<128x128xf32>
    %c0_13 = arith.constant 0 : index
    %c0_14 = arith.constant 0 : index
    %14 = vector.load %arg7[%c0_13, %c0_14] : memref<128x128xbf16, #tpu.memory_space<vmem>>, vector<128x128xbf16>
    %15 = arith.truncf %6 : vector<128x128xf32> to vector<128x128xbf16>
    %cst_15 = arith.constant dense<0.000000e+00> : vector<128x128xf32>
    %16 = tpu.matmul %15, %14, %cst_15 {dimension_numbers = #tpu.dot_dimension_numbers<[1], [0], [0], [1], [0, 0, 1, 1], [], []>} : vector<128x128xbf16>, vector<128x128xbf16>, vector<128x128xf32> -> vector<128x128xf32>
    %17 = arith.addf %13, %16 : vector<128x128xf32>
    %c0_16 = arith.constant 0 : index
    %c0_17 = arith.constant 0 : index
    %18 = vector.load %arg8[%c0_16, %c0_17] : memref<1x128xf32, #tpu.memory_space<vmem>>, vector<1x128xf32>
    %19 = vector.broadcast %18 : vector<1x128xf32> to vector<128x128xf32>
    %20 = arith.addf %17, %19 : vector<128x128xf32>
    %21 = arith.negf %20 : vector<128x128xf32>
    %22 = math.exp %21 : vector<128x128xf32>
    %cst_18 = arith.constant 1.000000e+00 : f32
    %23 = vector.broadcast %cst_18 : f32 to vector<128x128xf32>
    %24 = arith.addf %23, %22 : vector<128x128xf32>
    %25 = arith.divf %23, %24 : vector<128x128xf32>
    %26 = arith.mulf %20, %25 : vector<128x128xf32>
    %c0_19 = arith.constant 0 : index
    %c0_20 = arith.constant 0 : index
    %27 = vector.load %arg9[%c0_19, %c0_20] : memref<128x128xbf16, #tpu.memory_space<vmem>>, vector<128x128xbf16>
    %28 = arith.truncf %26 : vector<128x128xf32> to vector<128x128xbf16>
    %cst_21 = arith.constant dense<0.000000e+00> : vector<128x128xf32>
    %29 = tpu.matmul %28, %27, %cst_21 {dimension_numbers = #tpu.dot_dimension_numbers<[1], [0], [0], [1], [0, 0, 1, 1], [], []>} : vector<128x128xbf16>, vector<128x128xbf16>, vector<128x128xf32> -> vector<128x128xf32>
    %c0_22 = arith.constant 0 : index
    %c0_23 = arith.constant 0 : index
    %30 = vector.load %arg10[%c0_22, %c0_23] : memref<1x128xf32, #tpu.memory_space<vmem>>, vector<1x128xf32>
    %31 = vector.broadcast %30 : vector<1x128xf32> to vector<128x128xf32>
    %32 = arith.addf %29, %31 : vector<128x128xf32>
    %c0_24 = arith.constant 0 : index
    %c0_25 = arith.constant 0 : index
    %33 = vector.load %arg11[%c0_24, %c0_25] : memref<1x128xf32, #tpu.memory_space<vmem>>, vector<1x128xf32>
    %c0_26 = arith.constant 0 : index
    %c0_27 = arith.constant 0 : index
    %34 = vector.load %arg12[%c0_26, %c0_27] : memref<1x128xf32, #tpu.memory_space<vmem>>, vector<1x128xf32>
    %cst_28 = arith.constant dense<0.000000e+00> : vector<128xf32>
    %35 = vector.multi_reduction <add>, %32, %cst_28 [1] : vector<128x128xf32> to vector<128xf32>
    %36 = vector.shape_cast %35 : vector<128xf32> to vector<128x1xf32>
    %cst_29 = arith.constant 1.280000e+02 : f32
    %37 = vector.broadcast %cst_29 : f32 to vector<128x1xf32>
    %38 = arith.divf %36, %37 : vector<128x1xf32>
    %39 = vector.broadcast %38 : vector<128x1xf32> to vector<128x128xf32>
    %40 = arith.subf %32, %39 : vector<128x128xf32>
    %41 = arith.mulf %40, %40 : vector<128x128xf32>
    %cst_30 = arith.constant dense<0.000000e+00> : vector<128xf32>
    %42 = vector.multi_reduction <add>, %41, %cst_30 [1] : vector<128x128xf32> to vector<128xf32>
    %43 = vector.shape_cast %42 : vector<128xf32> to vector<128x1xf32>
    %cst_31 = arith.constant 1.280000e+02 : f32
    %44 = vector.broadcast %cst_31 : f32 to vector<128x1xf32>
    %45 = arith.divf %43, %44 : vector<128x1xf32>
    %46 = vector.broadcast %38 : vector<128x1xf32> to vector<128x128xf32>
    %47 = arith.subf %32, %46 : vector<128x128xf32>
    %cst_32 = arith.constant 9.99999974E-6 : f32
    %48 = vector.broadcast %cst_32 : f32 to vector<128x1xf32>
    %49 = arith.addf %45, %48 : vector<128x1xf32>
    %50 = math.rsqrt %49 : vector<128x1xf32>
    %51 = vector.broadcast %50 : vector<128x1xf32> to vector<128x128xf32>
    %52 = arith.mulf %47, %51 : vector<128x128xf32>
    %53 = vector.broadcast %33 : vector<1x128xf32> to vector<128x128xf32>
    %54 = arith.mulf %52, %53 : vector<128x128xf32>
    %55 = vector.broadcast %34 : vector<1x128xf32> to vector<128x128xf32>
    %56 = arith.addf %54, %55 : vector<128x128xf32>
    %57 = arith.addf %56, %6 : vector<128x128xf32>
    %c0_33 = arith.constant 0 : index
    %c0_34 = arith.constant 0 : index
    %58 = vector.load %arg13[%c0_33, %c0_34] : memref<128x128xf32, #tpu.memory_space<vmem>>, vector<128x128xf32>
    tpu.vector_store %arg13[%c0_33, %c0_34], %57 {strides = array<i32>} : memref<128x128xf32, #tpu.memory_space<vmem>>, vector<128x128xf32>,
    %c0_i32_35 = arith.constant 0 : i32
    %c128_i32_36 = arith.constant 128 : i32
    %59 = arith.addi %c0_i32_35, %c128_i32_36 : i32
    %c1_i32_37 = arith.constant 1 : i32
    scf.for %arg17 = %c0_i32_35 to %59 step %c1_i32_37  : i32 {
      %c128_i32_39 = arith.constant 128 : i32
      %60 = arith.muli %arg0, %c128_i32_39 : i32
      %61 = arith.addi %60, %arg17 : i32
      %62 = arith.index_cast %61 : i32 to index
      %63 = memref.load %arg2[%62] : memref<512xi32, #tpu.memory_space<smem>>
      %c512_i32 = arith.constant 512 : i32
      %64 = arith.cmpi slt, %61, %c512_i32 : i32
      %65 = arith.extui %64 : i1 to i32
      %c0_i32_40 = arith.constant 0 : i32
      %66 = arith.cmpi ne, %65, %c0_i32_40 : i32
      scf.if %66 {
        %67 = arith.index_cast %63 : i32 to index
        %c0_41 = arith.constant 0 : index
        %68 = vector.load %arg14[%67, %c0_41] : memref<256x128xf32, #tpu.memory_space<vmem>>, vector<1x128xf32>
        %69 = arith.index_cast %arg17 : i32 to index
        %c0_42 = arith.constant 0 : index
        %70 = vector.load %arg13[%69, %c0_42] : memref<128x128xf32, #tpu.memory_space<vmem>>, vector<1x128xf32>
        %71 = arith.addf %68, %70 : vector<1x128xf32>
        %72 = arith.index_cast %63 : i32 to index
        %c0_43 = arith.constant 0 : index
        %73 = vector.load %arg14[%72, %c0_43] : memref<256x128xf32, #tpu.memory_space<vmem>>, vector<1x128xf32>
        tpu.vector_store %arg14[%72, %c0_43], %71 {strides = array<i32>} : memref<256x128xf32, #tpu.memory_space<vmem>>, vector<1x128xf32>,
      } else {
      }
    }
    %c128_i32_38 = arith.constant 128 : i32
    return
  }
  func.func @transform_0(%arg0: i32, %arg1: memref<512xi32, #tpu.memory_space<smem>>, %arg2: memref<512xi32, #tpu.memory_space<smem>>) -> (i32, i32) {
    %c0_i32 = arith.constant 0 : i32
    %c0_i32_0 = arith.constant 0 : i32
    %c0_i32_1 = arith.constant 0 : i32
    return %c0_i32, %c0_i32_0 : i32, i32
  }
  func.func @transform_1(%arg0: i32, %arg1: memref<512xi32, #tpu.memory_space<smem>>, %arg2: memref<512xi32, #tpu.memory_space<smem>>) -> (i32, i32) {
    %c0_i32 = arith.constant 0 : i32
    %c0_i32_0 = arith.constant 0 : i32
    return %arg0, %c0_i32 : i32, i32
  }
  func.func @transform_2(%arg0: i32, %arg1: memref<512xi32, #tpu.memory_space<smem>>, %arg2: memref<512xi32, #tpu.memory_space<smem>>) -> (i32, i32) {
    %c0_i32 = arith.constant 0 : i32
    %c0_i32_0 = arith.constant 0 : i32
    %c0_i32_1 = arith.constant 0 : i32
    return %c0_i32, %c0_i32_0 : i32, i32
  }
  func.func @transform_3(%arg0: i32, %arg1: memref<512xi32, #tpu.memory_space<smem>>, %arg2: memref<512xi32, #tpu.memory_space<smem>>) -> (i32, i32) {
    %c0_i32 = arith.constant 0 : i32
    %c0_i32_0 = arith.constant 0 : i32
    %c0_i32_1 = arith.constant 0 : i32
    return %c0_i32, %c0_i32_0 : i32, i32
  }
  func.func @transform_4(%arg0: i32, %arg1: memref<512xi32, #tpu.memory_space<smem>>, %arg2: memref<512xi32, #tpu.memory_space<smem>>) -> (i32, i32) {
    %c0_i32 = arith.constant 0 : i32
    %c0_i32_0 = arith.constant 0 : i32
    %c0_i32_1 = arith.constant 0 : i32
    return %c0_i32, %c0_i32_0 : i32, i32
  }
  func.func @transform_5(%arg0: i32, %arg1: memref<512xi32, #tpu.memory_space<smem>>, %arg2: memref<512xi32, #tpu.memory_space<smem>>) -> (i32, i32) {
    %c0_i32 = arith.constant 0 : i32
    %c0_i32_0 = arith.constant 0 : i32
    %c0_i32_1 = arith.constant 0 : i32
    return %c0_i32, %c0_i32_0 : i32, i32
  }
  func.func @transform_6(%arg0: i32, %arg1: memref<512xi32, #tpu.memory_space<smem>>, %arg2: memref<512xi32, #tpu.memory_space<smem>>) -> (i32, i32) {
    %c0_i32 = arith.constant 0 : i32
    %c0_i32_0 = arith.constant 0 : i32
    %c0_i32_1 = arith.constant 0 : i32
    return %c0_i32, %c0_i32_0 : i32, i32
  }
  func.func @transform_7(%arg0: i32, %arg1: memref<512xi32, #tpu.memory_space<smem>>, %arg2: memref<512xi32, #tpu.memory_space<smem>>) -> (i32, i32) {
    %c0_i32 = arith.constant 0 : i32
    %c0_i32_0 = arith.constant 0 : i32
    %c0_i32_1 = arith.constant 0 : i32
    return %c0_i32, %c0_i32_0 : i32, i32
  }
  func.func @transform_8(%arg0: i32, %arg1: memref<512xi32, #tpu.memory_space<smem>>, %arg2: memref<512xi32, #tpu.memory_space<smem>>) -> (i32, i32) {
    %c0_i32 = arith.constant 0 : i32
    %c0_i32_0 = arith.constant 0 : i32
    %c0_i32_1 = arith.constant 0 : i32
    return %c0_i32, %c0_i32_0 : i32, i32
  }
  func.func @transform_9(%arg0: i32, %arg1: memref<512xi32, #tpu.memory_space<smem>>, %arg2: memref<512xi32, #tpu.memory_space<smem>>) -> (i32, i32) {
    %c0_i32 = arith.constant 0 : i32
    %c0_i32_0 = arith.constant 0 : i32
    %c0_i32_1 = arith.constant 0 : i32
    return %c0_i32, %c0_i32_0 : i32, i32
  }
  func.func @transform_10(%arg0: i32, %arg1: memref<512xi32, #tpu.memory_space<smem>>, %arg2: memref<512xi32, #tpu.memory_space<smem>>) -> (i32, i32) {
    %c0_i32 = arith.constant 0 : i32
    %c0_i32_0 = arith.constant 0 : i32
    return %arg0, %c0_i32 : i32, i32
  }
  func.func @transform_11(%arg0: i32, %arg1: memref<512xi32, #tpu.memory_space<smem>>, %arg2: memref<512xi32, #tpu.memory_space<smem>>) -> (i32, i32) {
    %c0_i32 = arith.constant 0 : i32
    %c0_i32_0 = arith.constant 0 : i32
    %c0_i32_1 = arith.constant 0 : i32
    return %c0_i32, %c0_i32_0 : i32, i32
  }
}

</mosaic_0001>

<llo_original>
// kernel: tpu_custom_call.1
$region0: #{tpu_custom_call.1}
  #allocation0 [shape = 'u32[]', space=smem, size = 0x4, offset = 0x4, fixed_abs, tag = 'smem constant byte address 0x4 - core index']
  #allocation1 [shape = 'u32[144,128]{1,0:T(1,128)}', space=vmem, size = 0x12000, scoped, tag = 'internal scratch']
  #allocation2 [shape = 'f32[128,128]{1,0:T(8,128)}', space=vmem, size = 0x10000, scoped, tag = 'scratch operand']
  #allocation3 [shape = 'f32[128,128]{1,0:T(8,128)}', space=vmem, size = 0x10000, scoped, tag = 'scratch operand']
  #allocation4 [shape = 's32[1]{0}', space=sflag, size = 0x4, scoped, tag = 'scoped memory for tpu_custom_call.1']
  #allocation5 [shape = 'u8[2048]{0}', space=smem, size = 0x800, scoped, tag = 'prefetched SMEM operand 0']
  #allocation6 [shape = 'u8[2048]{0}', space=smem, size = 0x800, scoped, tag = 'prefetched SMEM operand 1']
  %s0 = inlined_call_operand.hbm [shape: s32[512], index: 0, kind: input, shape index: {}]
  %s1 = inlined_call_operand.hbm [shape: s32[512], index: 1, kind: input, shape index: {}]
  %s2 = inlined_call_operand.hbm [shape: f32[256,128], index: 2, kind: input, shape index: {}]
  %s3 = inlined_call_operand.hbm [shape: f32[512,128], index: 3, kind: input, shape index: {}]
  %s4 = inlined_call_operand.hbm [shape: bf16[128,128], index: 4, kind: input, shape index: {}]
  %s5 = inlined_call_operand.hbm [shape: bf16[128,128], index: 5, kind: input, shape index: {}]
  %s6 = inlined_call_operand.hbm [shape: bf16[128,128], index: 6, kind: input, shape index: {}]
  %s7 = inlined_call_operand.vmem [shape: f32[1,128], index: 7, kind: input, shape index: {}]
  %s8 = inlined_call_operand.hbm [shape: bf16[128,128], index: 8, kind: input, shape index: {}]
  %s9 = inlined_call_operand.vmem [shape: f32[1,128], index: 9, kind: input, shape index: {}]
  %s10 = inlined_call_operand.vmem [shape: f32[1,128], index: 10, kind: input, shape index: {}]
  %s11 = inlined_call_operand.vmem [shape: f32[1,128], index: 11, kind: input, shape index: {}]
  %s12 = inlined_call_operand.hbm [shape: f32[512,128], index: 12, kind: output, shape index: {0}]
  %s13 = inlined_call_operand.hbm [shape: f32[256,128], index: 13, kind: output, shape index: {1}]
  %14 = xla_tuple %s12, %s13
  %s15 = sld [smem:[#allocation0]]
  $region127: #{tpu_custom_call.1} parent=0
    _
  %s17 = ssub.s32 1, %s15
  %s18 = scalar_select 0, %s17, %s15
  %20 = dma.hbm_to_smem %s0, 64, [#allocation5], [#allocation4]
  %22 = dma.hbm_to_smem %s1, 64, [#allocation6], [#allocation4]
  %23 = dma.done [#allocation4], 128
  %24 = sfence
  $region1: #{tpu_custom_call.1} parent=0
    #allocation7 [shape = 'u8[131072]{0}', space=vmem, size = 0x20000, scoped, tag = 'input window, operand 2, single buffered']
    #allocation8 [shape = 's32[2]{0}', space=sflag, size = 0x8, scoped, tag = 'scoped memory for tpu_custom_call.1']
    #allocation9 [shape = 's32[2]{0}', space=sflag, size = 0x8, scoped, tag = 'scoped memory for tpu_custom_call.1']
    #allocation10 [shape = 'u8[131072]{0}', space=vmem, size = 0x20000, scoped, tag = 'input window, operand 3']
    #allocation11 [shape = 's32[2]{0}', space=sflag, size = 0x8, scoped, tag = 'scoped memory for tpu_custom_call.1']
    #allocation12 [shape = 'u8[32768]{0}', space=vmem, size = 0x8000, scoped, tag = 'input window, operand 4, single buffered']
    #allocation13 [shape = 'u8[32768]{0}', space=vmem, size = 0x8000, scoped, tag = 'input window, operand 5, single buffered']
    #allocation14 [shape = 's32[1]{0}', space=sflag, size = 0x4, scoped, tag = 'scoped memory for tpu_custom_call.1']
    #allocation15 [shape = 'u8[32768]{0}', space=vmem, size = 0x8000, scoped, tag = 'input window, operand 6, single buffered']
    #allocation16 [shape = 'u8[32768]{0}', space=vmem, size = 0x8000, scoped, tag = 'input window, operand 8, single buffered']
    #allocation17 [shape = 's32[1]{0}', space=sflag, size = 0x4, scoped, tag = 'scoped memory for tpu_custom_call.1']
    #allocation18 [shape = 'u8[131072]{0}', space=vmem, size = 0x20000, scoped, tag = 'output window, operand 0']
    #allocation19 [shape = 'u8[131072]{0}', space=vmem, size = 0x20000, scoped, tag = 'output window, operand 1, single buffered']
    #allocation20 [shape = 's32[1]{0}', space=sflag, size = 0x4, scoped, tag = 'scoped memory for tpu_custom_call.1']
    %25 = vsyncpa [#allocation8], 0
    %26 = vsyncpa [#allocation11], 0
    %s27 = scalar_lea.sflag [#allocation11], 1
    %28 = vsyncpa %s27, 0
    %29 = vsyncpa [#allocation14], 0
    %30 = vsyncpa [#allocation17], 0
    %31 = vsyncpa [#allocation9], 0
    %s32 = scalar_lea.sflag [#allocation9], 1
    %33 = vsyncpa %s32, 0
    %34 = vsyncpa [#allocation20], 0
    loop: start=0, step=1, limit=6
    $region2: #{tpu_custom_call.1} parent=1 // loop_pre_header
      _
    $region3: #{tpu_custom_call.1} parent=1 // loop_header
      %s36 = sphi 0, %s40
      %p37 = scmp.ge.s32.totalorder %s36, 6
      %s44 = sphi 0, %s44
      %s46 = sphi 0, %s44
      %s47 = sphi 0, %s46
      %s61 = sphi 0, %s47
      %s67 = sphi 0, %s69
      %s70 = sphi 0, %s67
      %s71 = sphi 0, %s70
      %s87 = sphi 0, %s71
      %s91 = sphi 0, %s91
      %s93 = sphi 0, %s91
      %s94 = sphi 0, %s93
      %s108 = sphi 0, %s94
      %s112 = sphi 0, %s112
      %s114 = sphi 0, %s112
      %s115 = sphi 0, %s114
      %s129 = sphi 0, %s115
      %s133 = sphi 0, %s133
      %s135 = sphi 0, %s133
      %s136 = sphi 0, %s135
      %s150 = sphi 0, %s136
      %s154 = sphi 0, %s154
      %s156 = sphi 0, %s154
      %s157 = sphi 0, %s156
      %s171 = sphi 0, %s157
      %s175 = sphi 0, %s175
      %s177 = sphi 0, %s175
      %s178 = sphi 0, %s177
      %s192 = sphi 0, %s178
      %s196 = sphi 0, %s196
      %s198 = sphi 0, %s196
      %s199 = sphi 0, %s198
      %s213 = sphi 0, %s199
      %s217 = sphi 0, %s217
      %s219 = sphi 0, %s217
      %s220 = sphi 0, %s219
      %s234 = sphi 0, %s220
      %s238 = sphi 0, %s238
      %s240 = sphi 0, %s238
      %s241 = sphi 0, %s240
      %s255 = sphi 0, %s241
      %s261 = sphi 0, %s263
      %s264 = sphi 0, %s261
      %s265 = sphi 0, %s264
      %s281 = sphi 0, %s265
      %s285 = sphi 0, %s285
      %s287 = sphi 0, %s285
      %s288 = sphi 0, %s287
      %s302 = sphi 0, %s288
    $region4: #{tpu_custom_call.1} parent=1 // loop_header_branch
      %39 = sbr.rel (%p37) target = $region8
    $region5: #{tpu_custom_call.1} parent=1 // loop_body
      %s41 = ssub.s32 %s36, 1
      %s42 = ssub.s32 %s36, 2
      %s43 = sadd.s32 %s36, 1
      %s45 = sadd.s32 %s44, 1
      %p48 = scmp.eq.s32.totalorder %s36, 3
      %p49 = scmp.ne.s32.totalorder %s44, %s46
      %p50 = scmp.eq.s32.totalorder %s36, 0
      %p51 = por %p49, %p50
      %p52 = scmp.ne.s32.totalorder %s44, %s46
      %p53 = scmp.eq.s32.totalorder %s41, 3
      %p54 = por %p52, %p53
      %p55 = scmp.ne.s32.totalorder %s46, %s47
      %p56 = scmp.eq.s32.totalorder %s41, 0
      %p57 = por %p55, %p56
      %p58 = scmp.ne.s32.totalorder %s46, %s47
      %p59 = scmp.eq.s32.totalorder %s42, 3
      %p60 = por %p58, %p59
      %p62 = scmp.ne.s32.totalorder %s47, %s61
      %p63 = scmp.eq.s32.totalorder %s42, 0
      %p64 = por %p62, %p63
      %s65 = ssub.s32 %s36, %s43
      %p66 = scmp.eq.s32.totalorder %s65, 0
      %s68 = sadd.s32 %s67, 1
      %s69 = scalar_select %p66, %s67, %s68
      %p72 = pneg %p66
      %p73 = scmp.eq.s32.totalorder %s36, 3
      %p74 = por %p72, %p73
      %p75 = scmp.ne.s32.totalorder %s67, %s70
      %p76 = scmp.eq.s32.totalorder %s36, 0
      %p77 = por %p75, %p76
      %p78 = scmp.ne.s32.totalorder %s67, %s70
      %p79 = scmp.eq.s32.totalorder %s41, 3
      %p80 = por %p78, %p79
      %p81 = scmp.ne.s32.totalorder %s70, %s71
      %p82 = scmp.eq.s32.totalorder %s41, 0
      %p83 = por %p81, %p82
      %p84 = scmp.ne.s32.totalorder %s70, %s71
      %p85 = scmp.eq.s32.totalorder %s42, 3
      %p86 = por %p84, %p85
      %p88 = scmp.ne.s32.totalorder %s71, %s87
      %p89 = scmp.eq.s32.totalorder %s42, 0
      %p90 = por %p88, %p89
      %s92 = sadd.s32 %s91, 1
      %p95 = scmp.eq.s32.totalorder %s36, 3
      %p96 = scmp.ne.s32.totalorder %s91, %s93
      %p97 = scmp.eq.s32.totalorder %s36, 0
      %p98 = por %p96, %p97
      %p99 = scmp.ne.s32.totalorder %s91, %s93
      %p100 = scmp.eq.s32.totalorder %s41, 3
      %p101 = por %p99, %p100
      %p102 = scmp.ne.s32.totalorder %s93, %s94
      %p103 = scmp.eq.s32.totalorder %s41, 0
      %p104 = por %p102, %p103
      %p105 = scmp.ne.s32.totalorder %s93, %s94
      %p106 = scmp.eq.s32.totalorder %s42, 3
      %p107 = por %p105, %p106
      %p109 = scmp.ne.s32.totalorder %s94, %s108
      %p110 = scmp.eq.s32.totalorder %s42, 0
      %p111 = por %p109, %p110
      %s113 = sadd.s32 %s112, 1
      %p116 = scmp.eq.s32.totalorder %s36, 3
      %p117 = scmp.ne.s32.totalorder %s112, %s114
      %p118 = scmp.eq.s32.totalorder %s36, 0
      %p119 = por %p117, %p118
      %p120 = scmp.ne.s32.totalorder %s112, %s114
      %p121 = scmp.eq.s32.totalorder %s41, 3
      %p122 = por %p120, %p121
      %p123 = scmp.ne.s32.totalorder %s114, %s115
      %p124 = scmp.eq.s32.totalorder %s41, 0
      %p125 = por %p123, %p124
      %p126 = scmp.ne.s32.totalorder %s114, %s115
      %p127 = scmp.eq.s32.totalorder %s42, 3
      %p128 = por %p126, %p127
      %p130 = scmp.ne.s32.totalorder %s115, %s129
      %p131 = scmp.eq.s32.totalorder %s42, 0
      %p132 = por %p130, %p131
      %s134 = sadd.s32 %s133, 1
      %p137 = scmp.eq.s32.totalorder %s36, 3
      %p138 = scmp.ne.s32.totalorder %s133, %s135
      %p139 = scmp.eq.s32.totalorder %s36, 0
      %p140 = por %p138, %p139
      %p141 = scmp.ne.s32.totalorder %s133, %s135
      %p142 = scmp.eq.s32.totalorder %s41, 3
      %p143 = por %p141, %p142
      %p144 = scmp.ne.s32.totalorder %s135, %s136
      %p145 = scmp.eq.s32.totalorder %s41, 0
      %p146 = por %p144, %p145
      %p147 = scmp.ne.s32.totalorder %s135, %s136
      %p148 = scmp.eq.s32.totalorder %s42, 3
      %p149 = por %p147, %p148
      %p151 = scmp.ne.s32.totalorder %s136, %s150
      %p152 = scmp.eq.s32.totalorder %s42, 0
      %p153 = por %p151, %p152
      %s155 = sadd.s32 %s154, 1
      %p158 = scmp.eq.s32.totalorder %s36, 3
      %p159 = scmp.ne.s32.totalorder %s154, %s156
      %p160 = scmp.eq.s32.totalorder %s36, 0
      %p161 = por %p159, %p160
      %p162 = scmp.ne.s32.totalorder %s154, %s156
      %p163 = scmp.eq.s32.totalorder %s41, 3
      %p164 = por %p162, %p163
      %p165 = scmp.ne.s32.totalorder %s156, %s157
      %p166 = scmp.eq.s32.totalorder %s41, 0
      %p167 = por %p165, %p166
      %p168 = scmp.ne.s32.totalorder %s156, %s157
      %p169 = scmp.eq.s32.totalorder %s42, 3
      %p170 = por %p168, %p169
      %p172 = scmp.ne.s32.totalorder %s157, %s171
      %p173 = scmp.eq.s32.totalorder %s42, 0
      %p174 = por %p172, %p173
      %s176 = sadd.s32 %s175, 1
      %p179 = scmp.eq.s32.totalorder %s36, 3
      %p180 = scmp.ne.s32.totalorder %s175, %s177
      %p181 = scmp.eq.s32.totalorder %s36, 0
      %p182 = por %p180, %p181
      %p183 = scmp.ne.s32.totalorder %s175, %s177
      %p184 = scmp.eq.s32.totalorder %s41, 3
      %p185 = por %p183, %p184
      %p186 = scmp.ne.s32.totalorder %s177, %s178
      %p187 = scmp.eq.s32.totalorder %s41, 0
      %p188 = por %p186, %p187
      %p189 = scmp.ne.s32.totalorder %s177, %s178
      %p190 = scmp.eq.s32.totalorder %s42, 3
      %p191 = por %p189, %p190
      %p193 = scmp.ne.s32.totalorder %s178, %s192
      %p194 = scmp.eq.s32.totalorder %s42, 0
      %p195 = por %p193, %p194
      %s197 = sadd.s32 %s196, 1
      %p200 = scmp.eq.s32.totalorder %s36, 3
      %p201 = scmp.ne.s32.totalorder %s196, %s198
      %p202 = scmp.eq.s32.totalorder %s36, 0
      %p203 = por %p201, %p202
      %p204 = scmp.ne.s32.totalorder %s196, %s198
      %p205 = scmp.eq.s32.totalorder %s41, 3
      %p206 = por %p204, %p205
      %p207 = scmp.ne.s32.totalorder %s198, %s199
      %p208 = scmp.eq.s32.totalorder %s41, 0
      %p209 = por %p207, %p208
      %p210 = scmp.ne.s32.totalorder %s198, %s199
      %p211 = scmp.eq.s32.totalorder %s42, 3
      %p212 = por %p210, %p211
      %p214 = scmp.ne.s32.totalorder %s199, %s213
      %p215 = scmp.eq.s32.totalorder %s42, 0
      %p216 = por %p214, %p215
      %s218 = sadd.s32 %s217, 1
      %p221 = scmp.eq.s32.totalorder %s36, 3
      %p222 = scmp.ne.s32.totalorder %s217, %s219
      %p223 = scmp.eq.s32.totalorder %s36, 0
      %p224 = por %p222, %p223
      %p225 = scmp.ne.s32.totalorder %s217, %s219
      %p226 = scmp.eq.s32.totalorder %s41, 3
      %p227 = por %p225, %p226
      %p228 = scmp.ne.s32.totalorder %s219, %s220
      %p229 = scmp.eq.s32.totalorder %s41, 0
      %p230 = por %p228, %p229
      %p231 = scmp.ne.s32.totalorder %s219, %s220
      %p232 = scmp.eq.s32.totalorder %s42, 3
      %p233 = por %p231, %p232
      %p235 = scmp.ne.s32.totalorder %s220, %s234
      %p236 = scmp.eq.s32.totalorder %s42, 0
      %p237 = por %p235, %p236
      %s239 = sadd.s32 %s238, 1
      %p242 = scmp.eq.s32.totalorder %s36, 3
      %p243 = scmp.ne.s32.totalorder %s238, %s240
      %p244 = scmp.eq.s32.totalorder %s36, 0
      %p245 = por %p243, %p244
      %p246 = scmp.ne.s32.totalorder %s238, %s240
      %p247 = scmp.eq.s32.totalorder %s41, 3
      %p248 = por %p246, %p247
      %p249 = scmp.ne.s32.totalorder %s240, %s241
      %p250 = scmp.eq.s32.totalorder %s41, 0
      %p251 = por %p249, %p250
      %p252 = scmp.ne.s32.totalorder %s240, %s241
      %p253 = scmp.eq.s32.totalorder %s42, 3
      %p254 = por %p252, %p253
      %p256 = scmp.ne.s32.totalorder %s241, %s255
      %p257 = scmp.eq.s32.totalorder %s42, 0
      %p258 = por %p256, %p257
      %s259 = ssub.s32 %s36, %s43
      %p260 = scmp.eq.s32.totalorder %s259, 0
      %s262 = sadd.s32 %s261, 1
      %s263 = scalar_select %p260, %s261, %s262
      %p266 = pneg %p260
      %p267 = scmp.eq.s32.totalorder %s36, 3
      %p268 = por %p266, %p267
      %p269 = scmp.ne.s32.totalorder %s261, %s264
      %p270 = scmp.eq.s32.totalorder %s36, 0
      %p271 = por %p269, %p270
      %p272 = scmp.ne.s32.totalorder %s261, %s264
      %p273 = scmp.eq.s32.totalorder %s41, 3
      %p274 = por %p272, %p273
      %p275 = scmp.ne.s32.totalorder %s264, %s265
      %p276 = scmp.eq.s32.totalorder %s41, 0
      %p277 = por %p275, %p276
      %p278 = scmp.ne.s32.totalorder %s264, %s265
      %p279 = scmp.eq.s32.totalorder %s42, 3
      %p280 = por %p278, %p279
      %p282 = scmp.ne.s32.totalorder %s265, %s281
      %p283 = scmp.eq.s32.totalorder %s42, 0
      %p284 = por %p282, %p283
      %s286 = sadd.s32 %s285, 1
      %p289 = scmp.eq.s32.totalorder %s36, 3
      %p290 = scmp.ne.s32.totalorder %s285, %s287
      %p291 = scmp.eq.s32.totalorder %s36, 0
      %p292 = por %p290, %p291
      %p293 = scmp.ne.s32.totalorder %s285, %s287
      %p294 = scmp.eq.s32.totalorder %s41, 3
      %p295 = por %p293, %p294
      %p296 = scmp.ne.s32.totalorder %s287, %s288
      %p297 = scmp.eq.s32.totalorder %s41, 0
      %p298 = por %p296, %p297
      %p299 = scmp.ne.s32.totalorder %s287, %s288
      %p300 = scmp.eq.s32.totalorder %s42, 3
      %p301 = por %p299, %p300
      %p303 = scmp.ne.s32.totalorder %s288, %s302
      %p304 = scmp.eq.s32.totalorder %s42, 0
      %p305 = por %p303, %p304
      %p306 = scmp.le.s32.totalorder 1, %s36
      %p307 = scmp.lt.s32.totalorder %s36, 5
      %p308 = pnand %p306, %p307
      %p309 = pneg %p308
      // Predicated region
      $region9: #{tpu_custom_call.1} parent=5 // pred_check
        _
      $region10: #{tpu_custom_call.1} parent=5 // pred_check_branch
        %311 = sbr.rel (%p308) target = $region12
      $region11: #{tpu_custom_call.1} parent=5 // pred_region
        %s312 = ssub.s32 %s36, 1
        // Predicated region
        $region13: #{tpu_custom_call.1} parent=11 // pred_check
          %p313 = pneg %p57
        $region14: #{tpu_custom_call.1} parent=11 // pred_check_branch
          %315 = sbr.rel (%p313) target = $region16
        $region15: #{tpu_custom_call.1} parent=11 // pred_region
          %s317 = ssub.s32 4096, 4096
          %318 = vsyncadd [#allocation8], %s317
          %s319 = sshll.u32 [#allocation7], 4
          %s320 = int_to_ptr.vmem [resolvable:$true] %s319
          %325 = dma.hbm_to_vmem [thread:$0]  %s2, 4096, %s320, [#allocation8], 128, 128, 8
        $region16: #{tpu_custom_call.1} parent=11 // pred_fallthru
          _
        // Predicated region
        $region17: #{tpu_custom_call.1} parent=11 // pred_check
          %p326 = pneg %p104
        $region18: #{tpu_custom_call.1} parent=11 // pred_check_branch
          %328 = sbr.rel (%p326) target = $region20
        $region19: #{tpu_custom_call.1} parent=11 // pred_region
          %s330 = ssub.s32 1024, 1024
          %331 = vsyncadd [#allocation11], %s330
          %s332 = sshll.u32 [#allocation12], 4
          %s333 = int_to_ptr.vmem [resolvable:$true] %s332
          %338 = dma.hbm_to_vmem [thread:$0]  %s4, 1024, %s333, [#allocation11], 64, 64, 4
        $region20: #{tpu_custom_call.1} parent=11 // pred_fallthru
          _
        // Predicated region
        $region21: #{tpu_custom_call.1} parent=11 // pred_check
          %p339 = pneg %p125
        $region22: #{tpu_custom_call.1} parent=11 // pred_check_branch
          %341 = sbr.rel (%p339) target = $region24
        $region23: #{tpu_custom_call.1} parent=11 // pred_region
          %s343 = ssub.s32 1024, 1024
          %344 = vsyncadd [#allocation14], %s343
          %s345 = sshll.u32 [#allocation13], 4
          %s346 = int_to_ptr.vmem [resolvable:$true] %s345
          %351 = dma.hbm_to_vmem [thread:$0]  %s5, 1024, %s346, [#allocation14], 64, 64, 4
        $region24: #{tpu_custom_call.1} parent=11 // pred_fallthru
          _
        // Predicated region
        $region25: #{tpu_custom_call.1} parent=11 // pred_check
          %p352 = pneg %p146
        $region26: #{tpu_custom_call.1} parent=11 // pred_check_branch
          %354 = sbr.rel (%p352) target = $region28
        $region27: #{tpu_custom_call.1} parent=11 // pred_region
          %s356 = ssub.s32 1024, 1024
          %357 = vsyncadd [#allocation14], %s356
          %s358 = sshll.u32 [#allocation15], 4
          %s359 = int_to_ptr.vmem [resolvable:$true] %s358
          %364 = dma.hbm_to_vmem [thread:$0]  %s6, 1024, %s359, [#allocation14], 64, 64, 4
        $region28: #{tpu_custom_call.1} parent=11 // pred_fallthru
          _
        // Predicated region
        $region29: #{tpu_custom_call.1} parent=11 // pred_check
          %p365 = pneg %p167
        $region30: #{tpu_custom_call.1} parent=11 // pred_check_branch
          %367 = sbr.rel (%p365) target = $region32
        $region31: #{tpu_custom_call.1} parent=11 // pred_region
          _
        $region32: #{tpu_custom_call.1} parent=11 // pred_fallthru
          _
        // Predicated region
        $region33: #{tpu_custom_call.1} parent=11 // pred_check
          %p368 = pneg %p188
        $region34: #{tpu_custom_call.1} parent=11 // pred_check_branch
          %370 = sbr.rel (%p368) target = $region36
        $region35: #{tpu_custom_call.1} parent=11 // pred_region
          %s372 = ssub.s32 1024, 1024
          %373 = vsyncadd [#allocation17], %s372
          %s374 = sshll.u32 [#allocation16], 4
          %s375 = int_to_ptr.vmem [resolvable:$true] %s374
          %380 = dma.hbm_to_vmem [thread:$0]  %s8, 1024, %s375, [#allocation17], 64, 64, 4
        $region36: #{tpu_custom_call.1} parent=11 // pred_fallthru
          _
        // Predicated region
        $region37: #{tpu_custom_call.1} parent=11 // pred_check
          %p381 = pneg %p209
        $region38: #{tpu_custom_call.1} parent=11 // pred_check_branch
          %383 = sbr.rel (%p381) target = $region40
        $region39: #{tpu_custom_call.1} parent=11 // pred_region
          _
        $region40: #{tpu_custom_call.1} parent=11 // pred_fallthru
          _
        // Predicated region
        $region41: #{tpu_custom_call.1} parent=11 // pred_check
          %p384 = pneg %p230
        $region42: #{tpu_custom_call.1} parent=11 // pred_check_branch
          %386 = sbr.rel (%p384) target = $region44
        $region43: #{tpu_custom_call.1} parent=11 // pred_region
          _
        $region44: #{tpu_custom_call.1} parent=11 // pred_fallthru
          _
        // Predicated region
        $region45: #{tpu_custom_call.1} parent=11 // pred_check
          %p387 = pneg %p251
        $region46: #{tpu_custom_call.1} parent=11 // pred_check_branch
          %389 = sbr.rel (%p387) target = $region48
        $region47: #{tpu_custom_call.1} parent=11 // pred_region
          _
        $region48: #{tpu_custom_call.1} parent=11 // pred_fallthru
          _
      $region12: #{tpu_custom_call.1} parent=5 // pred_fallthru
        _
      %p390 = scmp.lt.s32.totalorder %s36, 4
      // Predicated region
      $region49: #{tpu_custom_call.1} parent=5 // pred_check
        %p391 = pneg %p390
      $region50: #{tpu_custom_call.1} parent=5 // pred_check_branch
        %393 = sbr.rel (%p391) target = $region52
      $region51: #{tpu_custom_call.1} parent=5 // pred_region
        // Predicated region
        $region53: #{tpu_custom_call.1} parent=51 // pred_check
          %p394 = pneg %p77
        $region54: #{tpu_custom_call.1} parent=51 // pred_check_branch
          %396 = sbr.rel (%p394) target = $region56
        $region55: #{tpu_custom_call.1} parent=51 // pred_region
          %s397 = sand.u32 %s36, 1
          %s398 = scalar_lea.sflag [#allocation11], %s397
          %s399 = sand.u32 %s67, 1
          %s400 = smul.addr %s399, 128
          %s401 = scalar_lea.vmem [#allocation10], %s400
          %s402 = smul.u32 16, %s36
          %s404 = ssub.s32 2048, 2048
          %405 = vsyncadd %s398, %s404
          %s406 = smul.addr %s402, 128
          %s407 = scalar_lea.hbm %s3, %s406
          %s408 = sshll.u32 %s401, 4
          %s409 = int_to_ptr.vmem [resolvable:$true] %s408
          %414 = dma.hbm_to_vmem [thread:$0]  %s407, 2048, %s409, %s398, 128, 128, 8
        $region56: #{tpu_custom_call.1} parent=51 // pred_fallthru
          _
      $region52: #{tpu_custom_call.1} parent=5 // pred_fallthru
        _
      %p415 = scmp.le.s32.totalorder 1, %s36
      %p416 = scmp.lt.s32.totalorder %s36, 5
      %p417 = pnand %p415, %p416
      %p418 = pneg %p417
      // Predicated region
      $region57: #{tpu_custom_call.1} parent=5 // pred_check
        _
      $region58: #{tpu_custom_call.1} parent=5 // pred_check_branch
        %420 = sbr.rel (%p417) target = $region60
      $region59: #{tpu_custom_call.1} parent=5 // pred_region
        %s421 = ssub.s32 %s36, 1
        // Predicated region
        $region61: #{tpu_custom_call.1} parent=59 // pred_check
          %p422 = pneg %p57
        $region62: #{tpu_custom_call.1} parent=59 // pred_check_branch
          %424 = sbr.rel (%p422) target = $region64
        $region63: #{tpu_custom_call.1} parent=59 // pred_region
          %425 = dma.done [#allocation8], 4096
        $region64: #{tpu_custom_call.1} parent=59 // pred_fallthru
          _
        %s426 = sand.u32 %s41, 1
        %s427 = scalar_lea.sflag [#allocation11], %s426
        %s428 = sand.u32 %s70, 1
        %s429 = smul.addr %s428, 128
        %s430 = scalar_lea.vmem [#allocation10], %s429
        // Predicated region
        $region65: #{tpu_custom_call.1} parent=59 // pred_check
          %p431 = pneg %p83
        $region66: #{tpu_custom_call.1} parent=59 // pred_check_branch
          %433 = sbr.rel (%p431) target = $region68
        $region67: #{tpu_custom_call.1} parent=59 // pred_region
          %434 = dma.done %s427, 2048
        $region68: #{tpu_custom_call.1} parent=59 // pred_fallthru
          _
        // Predicated region
        $region69: #{tpu_custom_call.1} parent=59 // pred_check
          %p435 = pneg %p104
        $region70: #{tpu_custom_call.1} parent=59 // pred_check_branch
          %437 = sbr.rel (%p435) target = $region72
        $region71: #{tpu_custom_call.1} parent=59 // pred_region
          %438 = dma.done [#allocation11], 1024
        $region72: #{tpu_custom_call.1} parent=59 // pred_fallthru
          _
        // Predicated region
        $region73: #{tpu_custom_call.1} parent=59 // pred_check
          %p439 = pneg %p125
        $region74: #{tpu_custom_call.1} parent=59 // pred_check_branch
          %441 = sbr.rel (%p439) target = $region76
        $region75: #{tpu_custom_call.1} parent=59 // pred_region
          %442 = dma.done [#allocation14], 1024
        $region76: #{tpu_custom_call.1} parent=59 // pred_fallthru
          _
        // Predicated region
        $region77: #{tpu_custom_call.1} parent=59 // pred_check
          %p443 = pneg %p146
        $region78: #{tpu_custom_call.1} parent=59 // pred_check_branch
          %445 = sbr.rel (%p443) target = $region80
        $region79: #{tpu_custom_call.1} parent=59 // pred_region
          %446 = dma.done [#allocation14], 1024
        $region80: #{tpu_custom_call.1} parent=59 // pred_fallthru
          _
        // Predicated region
        $region81: #{tpu_custom_call.1} parent=59 // pred_check
          %p447 = pneg %p188
        $region82: #{tpu_custom_call.1} parent=59 // pred_check_branch
          %449 = sbr.rel (%p447) target = $region84
        $region83: #{tpu_custom_call.1} parent=59 // pred_region
          %450 = dma.done [#allocation17], 1024
        $region84: #{tpu_custom_call.1} parent=59 // pred_fallthru
          _
        %p451 = pneg %p57
        %p452 = pneg %p54
        %s453 = sand.u32 %s41, 1
        %s454 = scalar_lea.sflag [#allocation11], %s453
        %s455 = sand.u32 %s70, 1
        %s456 = smul.addr %s455, 128
        %s457 = scalar_lea.vmem [#allocation10], %s456
        %p458 = pneg %p83
        %p459 = pneg %p80
        %p460 = pneg %p104
        %p461 = pneg %p101
        %p462 = pneg %p125
        %p463 = pneg %p122
        %p464 = pneg %p146
        %p465 = pneg %p143
        %p466 = pneg %p167
        %p467 = pneg %p164
        %p468 = pneg %p188
        %p469 = pneg %p185
        %p470 = pneg %p209
        %p471 = pneg %p206
        %p472 = pneg %p230
        %p473 = pneg %p227
        %p474 = pneg %p251
        %p475 = pneg %p248
        %p476 = pneg %p277
        %p477 = pneg %p274
        %s478 = sand.u32 %s264, 1
        %s479 = scalar_lea.sflag [#allocation9], %s478
        %s480 = sand.u32 %s264, 1
        %s481 = smul.addr %s480, 128
        %s482 = scalar_lea.vmem [#allocation18], %s481
        %p483 = pneg %p298
        %p484 = pneg %p295
        %s485 = smul.u32 16, %s41
        %s486 = smul.u32 16, %s41
        %p488 = scmp.eq.s32.totalorder %s41, 0
        // Predicated region
        $region85: #{tpu_custom_call.1} parent=59 // pred_check
          %p489 = pneg %p488
        $region86: #{tpu_custom_call.1} parent=59 // pred_check_branch
          %491 = sbr.rel (%p489) target = $region88
        $region87: #{tpu_custom_call.1} parent=59 // pred_region
          %492 = vst [vmem:[#allocation19] sm:$0xff] 0.0
          %493 = vst [vmem:[#allocation19 + $0x8] sm:$0xff] 0.0
          %494 = vst [vmem:[#allocation19 + $0x10] sm:$0xff] 0.0
          %495 = vst [vmem:[#allocation19 + $0x18] sm:$0xff] 0.0
          %496 = vst [vmem:[#allocation19 + $0x20] sm:$0xff] 0.0
          %497 = vst [vmem:[#allocation19 + $0x28] sm:$0xff] 0.0
          %498 = vst [vmem:[#allocation19 + $0x30] sm:$0xff] 0.0
          %499 = vst [vmem:[#allocation19 + $0x38] sm:$0xff] 0.0
          %500 = vst [vmem:[#allocation19 + $0x40] sm:$0xff] 0.0
          %501 = vst [vmem:[#allocation19 + $0x48] sm:$0xff] 0.0
          %502 = vst [vmem:[#allocation19 + $0x50] sm:$0xff] 0.0
          %503 = vst [vmem:[#allocation19 + $0x58] sm:$0xff] 0.0
          %504 = vst [vmem:[#allocation19 + $0x60] sm:$0xff] 0.0
          %505 = vst [vmem:[#allocation19 + $0x68] sm:$0xff] 0.0
          %506 = vst [vmem:[#allocation19 + $0x70] sm:$0xff] 0.0
          %507 = vst [vmem:[#allocation19 + $0x78] sm:$0xff] 0.0
          %508 = vst [vmem:[#allocation19 + $0x80] sm:$0xff] 0.0
          %509 = vst [vmem:[#allocation19 + $0x88] sm:$0xff] 0.0
          %510 = vst [vmem:[#allocation19 + $0x90] sm:$0xff] 0.0
          %511 = vst [vmem:[#allocation19 + $0x98] sm:$0xff] 0.0
          %512 = vst [vmem:[#allocation19 + $0xa0] sm:$0xff] 0.0
          %513 = vst [vmem:[#allocation19 + $0xa8] sm:$0xff] 0.0
          %514 = vst [vmem:[#allocation19 + $0xb0] sm:$0xff] 0.0
          %515 = vst [vmem:[#allocation19 + $0xb8] sm:$0xff] 0.0
          %516 = vst [vmem:[#allocation19 + $0xc0] sm:$0xff] 0.0
          %517 = vst [vmem:[#allocation19 + $0xc8] sm:$0xff] 0.0
          %518 = vst [vmem:[#allocation19 + $0xd0] sm:$0xff] 0.0
          %519 = vst [vmem:[#allocation19 + $0xd8] sm:$0xff] 0.0
          %520 = vst [vmem:[#allocation19 + $0xe0] sm:$0xff] 0.0
          %521 = vst [vmem:[#allocation19 + $0xe8] sm:$0xff] 0.0
          %522 = vst [vmem:[#allocation19 + $0xf0] sm:$0xff] 0.0
          %523 = vst [vmem:[#allocation19 + $0xf8] sm:$0xff] 0.0
        $region88: #{tpu_custom_call.1} parent=59 // pred_fallthru
          _
        loop: start=0, step=1, limit=128
        $region89: #{tpu_custom_call.1} parent=59 // loop_pre_header
          _
        $region90: #{tpu_custom_call.1} parent=59 // loop_header
          %s525 = sphi 0, %s529
          %p526 = scmp.ge.s32.totalorder %s525, 128
        $region91: #{tpu_custom_call.1} parent=59 // loop_header_branch
          %528 = sbr.rel (%p526) target = $region95
        $region92: #{tpu_custom_call.1} parent=59 // loop_body
          %s530 = smul.u32 %s41, 128
          %s531 = sadd.s32 %s530, %s525
          %s532 = sld [smem:[#allocation5 + %s531]]
          %s533 = sld [smem:[#allocation6 + %s531]]
          %s534 = scalar_lea.vmem [#allocation7], %s532
          %v535 = vld [vmem:[%s534] sm:$0x1]
          %s536 = scalar_lea.vmem [#allocation3], %s525
          %537 = vst [vmem:[%s536] sm:$0x1] %v535
          %s538 = scalar_lea.vmem [#allocation7], %s533
          %v539 = vld [vmem:[%s538] sm:$0x1]
          %s540 = scalar_lea.vmem [#allocation2], %s525
          %541 = vst [vmem:[%s540] sm:$0x1] %v539
        $region93: #{tpu_custom_call.1} parent=59 // loop_footer
          %s529 = sadd.s32 1, %s525
        $region94: #{tpu_custom_call.1} parent=59 // loop_footer_branch
          %524 = sbr.rel target = $region90
        $region95: #{tpu_custom_call.1} parent=59 // loop_exit
          _
        %v542 = vld [vmem:[#allocation2] sm:$0xff]
        %v543 = vld [vmem:[#allocation2 + $0x8] sm:$0xff]
        %v544 = vld [vmem:[#allocation2 + $0x10] sm:$0xff]
        %v545 = vld [vmem:[#allocation2 + $0x18] sm:$0xff]
        %v546 = vld [vmem:[#allocation2 + $0x20] sm:$0xff]
        %v547 = vld [vmem:[#allocation2 + $0x28] sm:$0xff]
        %v548 = vld [vmem:[#allocation2 + $0x30] sm:$0xff]
        %v549 = vld [vmem:[#allocation2 + $0x38] sm:$0xff]
        %v550 = vld [vmem:[#allocation2 + $0x40] sm:$0xff]
        %v551 = vld [vmem:[#allocation2 + $0x48] sm:$0xff]
        %v552 = vld [vmem:[#allocation2 + $0x50] sm:$0xff]
        %v553 = vld [vmem:[#allocation2 + $0x58] sm:$0xff]
        %v554 = vld [vmem:[#allocation2 + $0x60] sm:$0xff]
        %v555 = vld [vmem:[#allocation2 + $0x68] sm:$0xff]
        %v556 = vld [vmem:[#allocation2 + $0x70] sm:$0xff]
        %v557 = vld [vmem:[#allocation2 + $0x78] sm:$0xff]
        %v558 = vld [vmem:[#allocation3] sm:$0xff]
        %v559 = vld [vmem:[#allocation3 + $0x8] sm:$0xff]
        %v560 = vld [vmem:[#allocation3 + $0x10] sm:$0xff]
        %v561 = vld [vmem:[#allocation3 + $0x18] sm:$0xff]
        %v562 = vld [vmem:[#allocation3 + $0x20] sm:$0xff]
        %v563 = vld [vmem:[#allocation3 + $0x28] sm:$0xff]
        %v564 = vld [vmem:[#allocation3 + $0x30] sm:$0xff]
        %v565 = vld [vmem:[#allocation3 + $0x38] sm:$0xff]
        %v566 = vld [vmem:[#allocation3 + $0x40] sm:$0xff]
        %v567 = vld [vmem:[#allocation3 + $0x48] sm:$0xff]
        %v568 = vld [vmem:[#allocation3 + $0x50] sm:$0xff]
        %v569 = vld [vmem:[#allocation3 + $0x58] sm:$0xff]
        %v570 = vld [vmem:[#allocation3 + $0x60] sm:$0xff]
        %v571 = vld [vmem:[#allocation3 + $0x68] sm:$0xff]
        %v572 = vld [vmem:[#allocation3 + $0x70] sm:$0xff]
        %v573 = vld [vmem:[#allocation3 + $0x78] sm:$0xff]
        %v574 = vld [vmem:[%s430] sm:$0xff]
        %v575 = vld [vmem:[%s430 + $0x8] sm:$0xff]
        %v576 = vld [vmem:[%s430 + $0x10] sm:$0xff]
        %v577 = vld [vmem:[%s430 + $0x18] sm:$0xff]
        %v578 = vld [vmem:[%s430 + $0x20] sm:$0xff]
        %v579 = vld [vmem:[%s430 + $0x28] sm:$0xff]
        %v580 = vld [vmem:[%s430 + $0x30] sm:$0xff]
        %v581 = vld [vmem:[%s430 + $0x38] sm:$0xff]
        %v582 = vld [vmem:[%s430 + $0x40] sm:$0xff]
        %v583 = vld [vmem:[%s430 + $0x48] sm:$0xff]
        %v584 = vld [vmem:[%s430 + $0x50] sm:$0xff]
        %v585 = vld [vmem:[%s430 + $0x58] sm:$0xff]
        %v586 = vld [vmem:[%s430 + $0x60] sm:$0xff]
        %v587 = vld [vmem:[%s430 + $0x68] sm:$0xff]
        %v588 = vld [vmem:[%s430 + $0x70] sm:$0xff]
        %v589 = vld [vmem:[%s430 + $0x78] sm:$0xff]
        %v590 = vld [vmem:[#allocation12] sm:$0xf]
        %v591 = vld [vmem:[#allocation12 + $0x4] sm:$0xf]
        %v592 = vld [vmem:[#allocation12 + $0x8] sm:$0xf]
        %v593 = vld [vmem:[#allocation12 + $0xc] sm:$0xf]
        %v594 = vld [vmem:[#allocation12 + $0x10] sm:$0xf]
        %v595 = vld [vmem:[#allocation12 + $0x14] sm:$0xf]
        %v596 = vld [vmem:[#allocation12 + $0x18] sm:$0xf]
        %v597 = vld [vmem:[#allocation12 + $0x1c] sm:$0xf]
        %v598 = vld [vmem:[#allocation12 + $0x20] sm:$0xf]
        %v599 = vld [vmem:[#allocation12 + $0x24] sm:$0xf]
        %v600 = vld [vmem:[#allocation12 + $0x28] sm:$0xf]
        %v601 = vld [vmem:[#allocation12 + $0x2c] sm:$0xf]
        %v602 = vld [vmem:[#allocation12 + $0x30] sm:$0xf]
        %v603 = vld [vmem:[#allocation12 + $0x34] sm:$0xf]
        %v604 = vld [vmem:[#allocation12 + $0x38] sm:$0xf]
        %v605 = vld [vmem:[#allocation12 + $0x3c] sm:$0xf]
        %v606 = vpack.c.bf16 %v543, %v542
        %v607 = vpack.c.bf16 %v545, %v544
        %v608 = vpack.c.bf16 %v547, %v546
        %v609 = vpack.c.bf16 %v549, %v548
        %v610 = vpack.c.bf16 %v551, %v550
        %v611 = vpack.c.bf16 %v553, %v552
        %v612 = vpack.c.bf16 %v555, %v554
        %v613 = vpack.c.bf16 %v557, %v556
        %v614 = vld [vmem:[#allocation13] sm:$0xf]
        %v615 = vld [vmem:[#allocation13 + $0x4] sm:$0xf]
        %v616 = vld [vmem:[#allocation13 + $0x8] sm:$0xf]
        %v617 = vld [vmem:[#allocation13 + $0xc] sm:$0xf]
        %v618 = vld [vmem:[#allocation13 + $0x10] sm:$0xf]
        %v619 = vld [vmem:[#allocation13 + $0x14] sm:$0xf]
        %v620 = vld [vmem:[#allocation13 + $0x18] sm:$0xf]
        %v621 = vld [vmem:[#allocation13 + $0x1c] sm:$0xf]
        %v622 = vld [vmem:[#allocation13 + $0x20] sm:$0xf]
        %v623 = vld [vmem:[#allocation13 + $0x24] sm:$0xf]
        %v624 = vld [vmem:[#allocation13 + $0x28] sm:$0xf]
        %v625 = vld [vmem:[#allocation13 + $0x2c] sm:$0xf]
        %v626 = vld [vmem:[#allocation13 + $0x30] sm:$0xf]
        %v627 = vld [vmem:[#allocation13 + $0x34] sm:$0xf]
        %v628 = vld [vmem:[#allocation13 + $0x38] sm:$0xf]
        %v629 = vld [vmem:[#allocation13 + $0x3c] sm:$0xf]
        %v630 = vpack.c.bf16 %v559, %v558
        %v631 = vpack.c.bf16 %v561, %v560
        %v632 = vpack.c.bf16 %v563, %v562
        %v633 = vpack.c.bf16 %v565, %v564
        %v634 = vpack.c.bf16 %v567, %v566
        %v635 = vpack.c.bf16 %v569, %v568
        %v636 = vpack.c.bf16 %v571, %v570
        %v637 = vpack.c.bf16 %v573, %v572
        %v654 = vunpack.c.l.b16 %v614
        %v655 = vunpack.c.l.b16 %v615
        %v656 = vunpack.c.l.b16 %v616
        %v657 = vunpack.c.l.b16 %v617
        %v658 = vunpack.c.l.b16 %v618
        %v659 = vunpack.c.l.b16 %v619
        %v660 = vunpack.c.l.b16 %v620
        %v661 = vunpack.c.l.b16 %v621
        %v662 = vunpack.c.l.b16 %v622
        %v663 = vunpack.c.l.b16 %v623
        %v664 = vunpack.c.l.b16 %v624
        %v665 = vunpack.c.l.b16 %v625
        %v666 = vunpack.c.l.b16 %v626
        %v667 = vunpack.c.l.b16 %v627
        %v668 = vunpack.c.l.b16 %v628
        %v669 = vunpack.c.l.b16 %v629
        %v670 = vpack.c.b16 %v655, %v654
        %v671 = vpack.c.b16 %v657, %v656
        %v672 = vpack.c.b16 %v659, %v658
        %v673 = vpack.c.b16 %v661, %v660
        %v674 = vpack.c.b16 %v663, %v662
        %v675 = vpack.c.b16 %v665, %v664
        %v676 = vpack.c.b16 %v667, %v666
        %v677 = vpack.c.b16 %v669, %v668
        %686 = vmatprep.subr.bf16.mxu0 0
        %687 = vmatpush1.bf16.msra.mxu0 %v677
        %688 = vmatprep.subr.bf16.mxu0 0
        %689 = vmatpush1.bf16.msra.mxu0 %v676
        %690 = vmatprep.subr.bf16.mxu0 0
        %691 = vmatpush1.bf16.msra.mxu0 %v675
        %692 = vmatprep.subr.bf16.mxu0 0
        %693 = vmatpush1.bf16.msra.mxu0 %v674
        %694 = vmatprep.subr.bf16.mxu0 0
        %695 = vmatpush1.bf16.msra.mxu0 %v673
        %696 = vmatprep.subr.bf16.mxu0 0
        %697 = vmatpush1.bf16.msra.mxu0 %v672
        %698 = vmatprep.subr.bf16.mxu0 0
        %699 = vmatpush1.bf16.msra.mxu0 %v671
        %700 = vmatprep.subr.bf16.mxu0 0
        %701 = vmatpush1.bf16.msra.mxu0 %v670
        %702 = vmatprep.subr.bf16.mxu0 0
        %703 = vmatpush2.bf16.msra.mxu0 0
        %704 = vmatprep.subr.bf16.mxu0 0
        %705 = vmatpush2.bf16.msra.mxu0 0
        %706 = vmatprep.subr.bf16.mxu0 0
        %707 = vmatpush2.bf16.msra.mxu0 0
        %708 = vmatprep.subr.bf16.mxu0 0
        %709 = vmatpush2.bf16.msra.mxu0 0
        %710 = vmatprep.subr.bf16.mxu0 0
        %711 = vmatpush2.bf16.msra.mxu0 0
        %712 = vmatprep.subr.bf16.mxu0 0
        %713 = vmatpush2.bf16.msra.mxu0 0
        %714 = vmatprep.subr.bf16.mxu0 0
        %715 = vmatpush2.bf16.msra.mxu0 0
        %716 = vmatprep.subr.bf16.mxu0 0
        %717 = vmatpush2.bf16.msra.mxu0 0
        %718 = vmatprep.mubr.bf16.mxu0 0
        %719 = vmatmul.mubr.bf16.gmra.mxu0 %v630
        %v720 = vpop.f32.mrf.mxu0
        %v721 = vadd.f32 0.0, %v720
        %v722 = vpop.f32.mrf.mxu0
        %v723 = vpop.f32.mrf.mxu0
        %v724 = vadd.f32 0.0, %v723
        %v725 = vpop.f32.mrf.mxu0
        %726 = vmatprep.mubr.bf16.mxu0 0
        %727 = vmatmul.mubr.bf16.gmra.mxu0 %v631
        %v728 = vpop.f32.mrf.mxu0
        %v729 = vadd.f32 0.0, %v728
        %v730 = vpop.f32.mrf.mxu0
        %v731 = vpop.f32.mrf.mxu0
        %v732 = vadd.f32 0.0, %v731
        %v733 = vpop.f32.mrf.mxu0
        %734 = vmatprep.mubr.bf16.mxu0 0
        %735 = vmatmul.mubr.bf16.gmra.mxu0 %v632
        %v736 = vpop.f32.mrf.mxu0
        %v737 = vadd.f32 0.0, %v736
        %v738 = vpop.f32.mrf.mxu0
        %v739 = vpop.f32.mrf.mxu0
        %v740 = vadd.f32 0.0, %v739
        %v741 = vpop.f32.mrf.mxu0
        %742 = vmatprep.mubr.bf16.mxu0 0
        %743 = vmatmul.mubr.bf16.gmra.mxu0 %v633
        %v744 = vpop.f32.mrf.mxu0
        %v745 = vadd.f32 0.0, %v744
        %v746 = vpop.f32.mrf.mxu0
        %v747 = vpop.f32.mrf.mxu0
        %v748 = vadd.f32 0.0, %v747
        %v749 = vpop.f32.mrf.mxu0
        %750 = vmatprep.mubr.bf16.mxu0 0
        %751 = vmatmul.mubr.bf16.gmra.mxu0 %v634
        %v752 = vpop.f32.mrf.mxu0
        %v753 = vadd.f32 0.0, %v752
        %v754 = vpop.f32.mrf.mxu0
        %v755 = vpop.f32.mrf.mxu0
        %v756 = vadd.f32 0.0, %v755
        %v757 = vpop.f32.mrf.mxu0
        %758 = vmatprep.mubr.bf16.mxu0 0
        %759 = vmatmul.mubr.bf16.gmra.mxu0 %v635
        %v760 = vpop.f32.mrf.mxu0
        %v761 = vadd.f32 0.0, %v760
        %v762 = vpop.f32.mrf.mxu0
        %v763 = vpop.f32.mrf.mxu0
        %v764 = vadd.f32 0.0, %v763
        %v765 = vpop.f32.mrf.mxu0
        %766 = vmatprep.mubr.bf16.mxu0 0
        %767 = vmatmul.mubr.bf16.gmra.mxu0 %v636
        %v768 = vpop.f32.mrf.mxu0
        %v769 = vadd.f32 0.0, %v768
        %v770 = vpop.f32.mrf.mxu0
        %v771 = vpop.f32.mrf.mxu0
        %v772 = vadd.f32 0.0, %v771
        %v773 = vpop.f32.mrf.mxu0
        %774 = vmatprep.mubr.bf16.mxu0 0
        %775 = vmatmul.mubr.bf16.gmra.mxu0 %v637
        %v776 = vpop.f32.mrf.mxu0
        %v777 = vadd.f32 0.0, %v776
        %v778 = vpop.f32.mrf.mxu0
        %v779 = vpop.f32.mrf.mxu0
        %v780 = vadd.f32 0.0, %v779
        %v781 = vpop.f32.mrf.mxu0
        %782 = vdwg.mxu0
        %v799 = vunpack.c.l.b16 %v590
        %v800 = vunpack.c.l.b16 %v591
        %v801 = vunpack.c.l.b16 %v592
        %v802 = vunpack.c.l.b16 %v593
        %v803 = vunpack.c.l.b16 %v594
        %v804 = vunpack.c.l.b16 %v595
        %v805 = vunpack.c.l.b16 %v596
        %v806 = vunpack.c.l.b16 %v597
        %v807 = vunpack.c.l.b16 %v598
        %v808 = vunpack.c.l.b16 %v599
        %v809 = vunpack.c.l.b16 %v600
        %v810 = vunpack.c.l.b16 %v601
        %v811 = vunpack.c.l.b16 %v602
        %v812 = vunpack.c.l.b16 %v603
        %v813 = vunpack.c.l.b16 %v604
        %v814 = vunpack.c.l.b16 %v605
        %v815 = vpack.c.b16 %v800, %v799
        %v816 = vpack.c.b16 %v802, %v801
        %v817 = vpack.c.b16 %v804, %v803
        %v818 = vpack.c.b16 %v806, %v805
        %v819 = vpack.c.b16 %v808, %v807
        %v820 = vpack.c.b16 %v810, %v809
        %v821 = vpack.c.b16 %v812, %v811
        %v822 = vpack.c.b16 %v814, %v813
        %831 = vmatprep.subr.bf16.mxu0 0
        %832 = vmatpush1.bf16.msra.mxu0 %v822
        %833 = vmatprep.subr.bf16.mxu0 0
        %834 = vmatpush1.bf16.msra.mxu0 %v821
        %835 = vmatprep.subr.bf16.mxu0 0
        %836 = vmatpush1.bf16.msra.mxu0 %v820
        %837 = vmatprep.subr.bf16.mxu0 0
        %838 = vmatpush1.bf16.msra.mxu0 %v819
        %839 = vmatprep.subr.bf16.mxu0 0
        %840 = vmatpush1.bf16.msra.mxu0 %v818
        %841 = vmatprep.subr.bf16.mxu0 0
        %842 = vmatpush1.bf16.msra.mxu0 %v817
        %843 = vmatprep.subr.bf16.mxu0 0
        %844 = vmatpush1.bf16.msra.mxu0 %v816
        %845 = vmatprep.subr.bf16.mxu0 0
        %846 = vmatpush1.bf16.msra.mxu0 %v815
        %847 = vmatprep.subr.bf16.mxu0 0
        %848 = vmatpush2.bf16.msra.mxu0 0
        %849 = vmatprep.subr.bf16.mxu0 0
        %850 = vmatpush2.bf16.msra.mxu0 0
        %851 = vmatprep.subr.bf16.mxu0 0
        %852 = vmatpush2.bf16.msra.mxu0 0
        %853 = vmatprep.subr.bf16.mxu0 0
        %854 = vmatpush2.bf16.msra.mxu0 0
        %855 = vmatprep.subr.bf16.mxu0 0
        %856 = vmatpush2.bf16.msra.mxu0 0
        %857 = vmatprep.subr.bf16.mxu0 0
        %858 = vmatpush2.bf16.msra.mxu0 0
        %859 = vmatprep.subr.bf16.mxu0 0
        %860 = vmatpush2.bf16.msra.mxu0 0
        %861 = vmatprep.subr.bf16.mxu0 0
        %862 = vmatpush2.bf16.msra.mxu0 0
        %863 = vmatprep.mubr.bf16.mxu0 0
        %864 = vmatmul.mubr.bf16.gmra.mxu0 %v606
        %v865 = vpop.f32.mrf.mxu0
        %v866 = vadd.f32 %v721, %v865
        %v867 = vpop.f32.mrf.mxu0
        %v868 = vpop.f32.mrf.mxu0
        %v869 = vadd.f32 %v724, %v868
        %v870 = vpop.f32.mrf.mxu0
        %871 = vmatprep.mubr.bf16.mxu0 0
        %872 = vmatmul.mubr.bf16.gmra.mxu0 %v607
        %v873 = vpop.f32.mrf.mxu0
        %v874 = vadd.f32 %v729, %v873
        %v875 = vpop.f32.mrf.mxu0
        %v876 = vpop.f32.mrf.mxu0
        %v877 = vadd.f32 %v732, %v876
        %v878 = vpop.f32.mrf.mxu0
        %879 = vmatprep.mubr.bf16.mxu0 0
        %880 = vmatmul.mubr.bf16.gmra.mxu0 %v608
        %v881 = vpop.f32.mrf.mxu0
        %v882 = vadd.f32 %v737, %v881
        %v883 = vpop.f32.mrf.mxu0
        %v884 = vpop.f32.mrf.mxu0
        %v885 = vadd.f32 %v740, %v884
        %v886 = vpop.f32.mrf.mxu0
        %887 = vmatprep.mubr.bf16.mxu0 0
        %888 = vmatmul.mubr.bf16.gmra.mxu0 %v609
        %v889 = vpop.f32.mrf.mxu0
        %v890 = vadd.f32 %v745, %v889
        %v891 = vpop.f32.mrf.mxu0
        %v892 = vpop.f32.mrf.mxu0
        %v893 = vadd.f32 %v748, %v892
        %v894 = vpop.f32.mrf.mxu0
        %895 = vmatprep.mubr.bf16.mxu0 0
        %896 = vmatmul.mubr.bf16.gmra.mxu0 %v610
        %v897 = vpop.f32.mrf.mxu0
        %v898 = vadd.f32 %v753, %v897
        %v899 = vpop.f32.mrf.mxu0
        %v900 = vpop.f32.mrf.mxu0
        %v901 = vadd.f32 %v756, %v900
        %v902 = vpop.f32.mrf.mxu0
        %903 = vmatprep.mubr.bf16.mxu0 0
        %904 = vmatmul.mubr.bf16.gmra.mxu0 %v611
        %v905 = vpop.f32.mrf.mxu0
        %v906 = vadd.f32 %v761, %v905
        %v907 = vpop.f32.mrf.mxu0
        %v908 = vpop.f32.mrf.mxu0
        %v909 = vadd.f32 %v764, %v908
        %v910 = vpop.f32.mrf.mxu0
        %911 = vmatprep.mubr.bf16.mxu0 0
        %912 = vmatmul.mubr.bf16.gmra.mxu0 %v612
        %v913 = vpop.f32.mrf.mxu0
        %v914 = vadd.f32 %v769, %v913
        %v915 = vpop.f32.mrf.mxu0
        %v916 = vpop.f32.mrf.mxu0
        %v917 = vadd.f32 %v772, %v916
        %v918 = vpop.f32.mrf.mxu0
        %919 = vmatprep.mubr.bf16.mxu0 0
        %920 = vmatmul.mubr.bf16.gmra.mxu0 %v613
        %v921 = vpop.f32.mrf.mxu0
        %v922 = vadd.f32 %v777, %v921
        %v923 = vpop.f32.mrf.mxu0
        %v924 = vpop.f32.mrf.mxu0
        %v925 = vadd.f32 %v780, %v924
        %v926 = vpop.f32.mrf.mxu0
        %927 = vdwg.mxu0
        %v928 = vld [vmem:[#allocation15] sm:$0xf]
        %v929 = vld [vmem:[#allocation15 + $0x4] sm:$0xf]
        %v930 = vld [vmem:[#allocation15 + $0x8] sm:$0xf]
        %v931 = vld [vmem:[#allocation15 + $0xc] sm:$0xf]
        %v932 = vld [vmem:[#allocation15 + $0x10] sm:$0xf]
        %v933 = vld [vmem:[#allocation15 + $0x14] sm:$0xf]
        %v934 = vld [vmem:[#allocation15 + $0x18] sm:$0xf]
        %v935 = vld [vmem:[#allocation15 + $0x1c] sm:$0xf]
        %v936 = vld [vmem:[#allocation15 + $0x20] sm:$0xf]
        %v937 = vld [vmem:[#allocation15 + $0x24] sm:$0xf]
        %v938 = vld [vmem:[#allocation15 + $0x28] sm:$0xf]
        %v939 = vld [vmem:[#allocation15 + $0x2c] sm:$0xf]
        %v940 = vld [vmem:[#allocation15 + $0x30] sm:$0xf]
        %v941 = vld [vmem:[#allocation15 + $0x34] sm:$0xf]
        %v942 = vld [vmem:[#allocation15 + $0x38] sm:$0xf]
        %v943 = vld [vmem:[#allocation15 + $0x3c] sm:$0xf]
        %v944 = vpack.c.bf16 %v575, %v574
        %v945 = vpack.c.bf16 %v577, %v576
        %v946 = vpack.c.bf16 %v579, %v578
        %v947 = vpack.c.bf16 %v581, %v580
        %v948 = vpack.c.bf16 %v583, %v582
        %v949 = vpack.c.bf16 %v585, %v584
        %v950 = vpack.c.bf16 %v587, %v586
        %v951 = vpack.c.bf16 %v589, %v588
        %v968 = vunpack.c.l.b16 %v928
        %v969 = vunpack.c.l.b16 %v929
        %v970 = vunpack.c.l.b16 %v930
        %v971 = vunpack.c.l.b16 %v931
        %v972 = vunpack.c.l.b16 %v932
        %v973 = vunpack.c.l.b16 %v933
        %v974 = vunpack.c.l.b16 %v934
        %v975 = vunpack.c.l.b16 %v935
        %v976 = vunpack.c.l.b16 %v936
        %v977 = vunpack.c.l.b16 %v937
        %v978 = vunpack.c.l.b16 %v938
        %v979 = vunpack.c.l.b16 %v939
        %v980 = vunpack.c.l.b16 %v940
        %v981 = vunpack.c.l.b16 %v941
        %v982 = vunpack.c.l.b16 %v942
        %v983 = vunpack.c.l.b16 %v943
        %v984 = vpack.c.b16 %v969, %v968
        %v985 = vpack.c.b16 %v971, %v970
        %v986 = vpack.c.b16 %v973, %v972
        %v987 = vpack.c.b16 %v975, %v974
        %v988 = vpack.c.b16 %v977, %v976
        %v989 = vpack.c.b16 %v979, %v978
        %v990 = vpack.c.b16 %v981, %v980
        %v991 = vpack.c.b16 %v983, %v982
        %1000 = vmatprep.subr.bf16.mxu0 0
        %1001 = vmatpush1.bf16.msra.mxu0 %v991
        %1002 = vmatprep.subr.bf16.mxu0 0
        %1003 = vmatpush1.bf16.msra.mxu0 %v990
        %1004 = vmatprep.subr.bf16.mxu0 0
        %1005 = vmatpush1.bf16.msra.mxu0 %v989
        %1006 = vmatprep.subr.bf16.mxu0 0
        %1007 = vmatpush1.bf16.msra.mxu0 %v988
        %1008 = vmatprep.subr.bf16.mxu0 0
        %1009 = vmatpush1.bf16.msra.mxu0 %v987
        %1010 = vmatprep.subr.bf16.mxu0 0
        %1011 = vmatpush1.bf16.msra.mxu0 %v986
        %1012 = vmatprep.subr.bf16.mxu0 0
        %1013 = vmatpush1.bf16.msra.mxu0 %v985
        %1014 = vmatprep.subr.bf16.mxu0 0
        %1015 = vmatpush1.bf16.msra.mxu0 %v984
        %1016 = vmatprep.subr.bf16.mxu0 0
        %1017 = vmatpush2.bf16.msra.mxu0 0
        %1018 = vmatprep.subr.bf16.mxu0 0
        %1019 = vmatpush2.bf16.msra.mxu0 0
        %1020 = vmatprep.subr.bf16.mxu0 0
        %1021 = vmatpush2.bf16.msra.mxu0 0
        %1022 = vmatprep.subr.bf16.mxu0 0
        %1023 = vmatpush2.bf16.msra.mxu0 0
        %1024 = vmatprep.subr.bf16.mxu0 0
        %1025 = vmatpush2.bf16.msra.mxu0 0
        %1026 = vmatprep.subr.bf16.mxu0 0
        %1027 = vmatpush2.bf16.msra.mxu0 0
        %1028 = vmatprep.subr.bf16.mxu0 0
        %1029 = vmatpush2.bf16.msra.mxu0 0
        %1030 = vmatprep.subr.bf16.mxu0 0
        %1031 = vmatpush2.bf16.msra.mxu0 0
        %1032 = vmatprep.mubr.bf16.mxu0 0
        %1033 = vmatmul.mubr.bf16.gmra.mxu0 %v944
        %v1034 = vpop.f32.mrf.mxu0
        %v1035 = vadd.f32 0.0, %v1034
        %v1036 = vpop.f32.mrf.mxu0
        %v1037 = vpop.f32.mrf.mxu0
        %v1038 = vadd.f32 0.0, %v1037
        %v1039 = vpop.f32.mrf.mxu0
        %1040 = vmatprep.mubr.bf16.mxu0 0
        %1041 = vmatmul.mubr.bf16.gmra.mxu0 %v945
        %v1042 = vpop.f32.mrf.mxu0
        %v1043 = vadd.f32 0.0, %v1042
        %v1044 = vpop.f32.mrf.mxu0
        %v1045 = vpop.f32.mrf.mxu0
        %v1046 = vadd.f32 0.0, %v1045
        %v1047 = vpop.f32.mrf.mxu0
        %1048 = vmatprep.mubr.bf16.mxu0 0
        %1049 = vmatmul.mubr.bf16.gmra.mxu0 %v946
        %v1050 = vpop.f32.mrf.mxu0
        %v1051 = vadd.f32 0.0, %v1050
        %v1052 = vpop.f32.mrf.mxu0
        %v1053 = vpop.f32.mrf.mxu0
        %v1054 = vadd.f32 0.0, %v1053
        %v1055 = vpop.f32.mrf.mxu0
        %1056 = vmatprep.mubr.bf16.mxu0 0
        %1057 = vmatmul.mubr.bf16.gmra.mxu0 %v947
        %v1058 = vpop.f32.mrf.mxu0
        %v1059 = vadd.f32 0.0, %v1058
        %v1060 = vpop.f32.mrf.mxu0
        %v1061 = vpop.f32.mrf.mxu0
        %v1062 = vadd.f32 0.0, %v1061
        %v1063 = vpop.f32.mrf.mxu0
        %1064 = vmatprep.mubr.bf16.mxu0 0
        %1065 = vmatmul.mubr.bf16.gmra.mxu0 %v948
        %v1066 = vpop.f32.mrf.mxu0
        %v1067 = vadd.f32 0.0, %v1066
        %v1068 = vpop.f32.mrf.mxu0
        %v1069 = vpop.f32.mrf.mxu0
        %v1070 = vadd.f32 0.0, %v1069
        %v1071 = vpop.f32.mrf.mxu0
        %1072 = vmatprep.mubr.bf16.mxu0 0
        %1073 = vmatmul.mubr.bf16.gmra.mxu0 %v949
        %v1074 = vpop.f32.mrf.mxu0
        %v1075 = vadd.f32 0.0, %v1074
        %v1076 = vpop.f32.mrf.mxu0
        %v1077 = vpop.f32.mrf.mxu0
        %v1078 = vadd.f32 0.0, %v1077
        %v1079 = vpop.f32.mrf.mxu0
        %1080 = vmatprep.mubr.bf16.mxu0 0
        %1081 = vmatmul.mubr.bf16.gmra.mxu0 %v950
        %v1082 = vpop.f32.mrf.mxu0
        %v1083 = vadd.f32 0.0, %v1082
        %v1084 = vpop.f32.mrf.mxu0
        %v1085 = vpop.f32.mrf.mxu0
        %v1086 = vadd.f32 0.0, %v1085
        %v1087 = vpop.f32.mrf.mxu0
        %1088 = vmatprep.mubr.bf16.mxu0 0
        %1089 = vmatmul.mubr.bf16.gmra.mxu0 %v951
        %v1090 = vpop.f32.mrf.mxu0
        %v1091 = vadd.f32 0.0, %v1090
        %v1092 = vpop.f32.mrf.mxu0
        %v1093 = vpop.f32.mrf.mxu0
        %v1094 = vadd.f32 0.0, %v1093
        %v1095 = vpop.f32.mrf.mxu0
        %1096 = vdwg.mxu0
        %v1097 = vadd.f32 %v866, %v1035
        %v1098 = vadd.f32 %v869, %v1038
        %v1099 = vadd.f32 %v874, %v1043
        %v1100 = vadd.f32 %v877, %v1046
        %v1101 = vadd.f32 %v882, %v1051
        %v1102 = vadd.f32 %v885, %v1054
        %v1103 = vadd.f32 %v890, %v1059
        %v1104 = vadd.f32 %v893, %v1062
        %v1105 = vadd.f32 %v898, %v1067
        %v1106 = vadd.f32 %v901, %v1070
        %v1107 = vadd.f32 %v906, %v1075
        %v1108 = vadd.f32 %v909, %v1078
        %v1109 = vadd.f32 %v914, %v1083
        %v1110 = vadd.f32 %v917, %v1086
        %v1111 = vadd.f32 %v922, %v1091
        %v1112 = vadd.f32 %v925, %v1094
        %v1113 = vld [vmem:[%s7] sm:$0x1]
        %v1115 = vlaneseq
        %v1116 = vshrl.u32 %v1115, 7
        %v1117 = vsub.s32 0, %v1116
        %v1118 = vrot.slane %v1113, %v1117
        %v1120 = vadd.f32 %v1097, %v1118
        %v1121 = vadd.f32 %v1098, %v1118
        %v1122 = vadd.f32 %v1099, %v1118
        %v1123 = vadd.f32 %v1100, %v1118
        %v1124 = vadd.f32 %v1101, %v1118
        %v1125 = vadd.f32 %v1102, %v1118
        %v1126 = vadd.f32 %v1103, %v1118
        %v1127 = vadd.f32 %v1104, %v1118
        %v1128 = vadd.f32 %v1105, %v1118
        %v1129 = vadd.f32 %v1106, %v1118
        %v1130 = vadd.f32 %v1107, %v1118
        %v1131 = vadd.f32 %v1108, %v1118
        %v1132 = vadd.f32 %v1109, %v1118
        %v1133 = vadd.f32 %v1110, %v1118
        %v1134 = vadd.f32 %v1111, %v1118
        %v1135 = vadd.f32 %v1112, %v1118
        %v1136 = vxor.u32 %v1120, 2147483648
        %v1137 = vxor.u32 %v1121, 2147483648
        %v1138 = vxor.u32 %v1122, 2147483648
        %v1139 = vxor.u32 %v1123, 2147483648
        %v1140 = vxor.u32 %v1124, 2147483648
        %v1141 = vxor.u32 %v1125, 2147483648
        %v1142 = vxor.u32 %v1126, 2147483648
        %v1143 = vxor.u32 %v1127, 2147483648
        %v1144 = vxor.u32 %v1128, 2147483648
        %v1145 = vxor.u32 %v1129, 2147483648
        %v1146 = vxor.u32 %v1130, 2147483648
        %v1147 = vxor.u32 %v1131, 2147483648
        %v1148 = vxor.u32 %v1132, 2147483648
        %v1149 = vxor.u32 %v1133, 2147483648
        %v1150 = vxor.u32 %v1134, 2147483648
        %v1151 = vxor.u32 %v1135, 2147483648
        %v1152 = vmul.f32 %v1136, 1.442695
        %v1153 = vpow.pop %v1152
        %v1154 = vmul.f32 %v1137, 1.442695
        %v1155 = vpow.pop %v1154
        %v1156 = vmul.f32 %v1138, 1.442695
        %v1157 = vpow.pop %v1156
        %v1158 = vmul.f32 %v1139, 1.442695
        %v1159 = vpow.pop %v1158
        %v1160 = vmul.f32 %v1140, 1.442695
        %v1161 = vpow.pop %v1160
        %v1162 = vmul.f32 %v1141, 1.442695
        %v1163 = vpow.pop %v1162
        %v1164 = vmul.f32 %v1142, 1.442695
        %v1165 = vpow.pop %v1164
        %v1166 = vmul.f32 %v1143, 1.442695
        %v1167 = vpow.pop %v1166
        %v1168 = vmul.f32 %v1144, 1.442695
        %v1169 = vpow.pop %v1168
        %v1170 = vmul.f32 %v1145, 1.442695
        %v1171 = vpow.pop %v1170
        %v1172 = vmul.f32 %v1146, 1.442695
        %v1173 = vpow.pop %v1172
        %v1174 = vmul.f32 %v1147, 1.442695
        %v1175 = vpow.pop %v1174
        %v1176 = vmul.f32 %v1148, 1.442695
        %v1177 = vpow.pop %v1176
        %v1178 = vmul.f32 %v1149, 1.442695
        %v1179 = vpow.pop %v1178
        %v1180 = vmul.f32 %v1150, 1.442695
        %v1181 = vpow.pop %v1180
        %v1182 = vmul.f32 %v1151, 1.442695
        %v1183 = vpow.pop %v1182
        %v1184 = vadd.f32 %v1153, 1.0
        %v1185 = vadd.f32 %v1155, 1.0
        %v1186 = vadd.f32 %v1157, 1.0
        %v1187 = vadd.f32 %v1159, 1.0
        %v1188 = vadd.f32 %v1161, 1.0
        %v1189 = vadd.f32 %v1163, 1.0
        %v1190 = vadd.f32 %v1165, 1.0
        %v1191 = vadd.f32 %v1167, 1.0
        %v1192 = vadd.f32 %v1169, 1.0
        %v1193 = vadd.f32 %v1171, 1.0
        %v1194 = vadd.f32 %v1173, 1.0
        %v1195 = vadd.f32 %v1175, 1.0
        %v1196 = vadd.f32 %v1177, 1.0
        %v1197 = vadd.f32 %v1179, 1.0
        %v1198 = vadd.f32 %v1181, 1.0
        %v1199 = vadd.f32 %v1183, 1.0
        %v1200 = vrcp.pop %v1184
        %v1201 = vmul.f32 1.0, %v1200
        %v1202 = vrcp.pop %v1185
        %v1203 = vmul.f32 1.0, %v1202
        %v1204 = vrcp.pop %v1186
        %v1205 = vmul.f32 1.0, %v1204
        %v1206 = vrcp.pop %v1187
        %v1207 = vmul.f32 1.0, %v1206
        %v1208 = vrcp.pop %v1188
        %v1209 = vmul.f32 1.0, %v1208
        %v1210 = vrcp.pop %v1189
        %v1211 = vmul.f32 1.0, %v1210
        %v1212 = vrcp.pop %v1190
        %v1213 = vmul.f32 1.0, %v1212
        %v1214 = vrcp.pop %v1191
        %v1215 = vmul.f32 1.0, %v1214
        %v1216 = vrcp.pop %v1192
        %v1217 = vmul.f32 1.0, %v1216
        %v1218 = vrcp.pop %v1193
        %v1219 = vmul.f32 1.0, %v1218
        %v1220 = vrcp.pop %v1194
        %v1221 = vmul.f32 1.0, %v1220
        %v1222 = vrcp.pop %v1195
        %v1223 = vmul.f32 1.0, %v1222
        %v1224 = vrcp.pop %v1196
        %v1225 = vmul.f32 1.0, %v1224
        %v1226 = vrcp.pop %v1197
        %v1227 = vmul.f32 1.0, %v1226
        %v1228 = vrcp.pop %v1198
        %v1229 = vmul.f32 1.0, %v1228
        %v1230 = vrcp.pop %v1199
        %v1231 = vmul.f32 1.0, %v1230
        %v1232 = vmul.f32 %v1120, %v1201
        %v1233 = vmul.f32 %v1121, %v1203
        %v1234 = vmul.f32 %v1122, %v1205
        %v1235 = vmul.f32 %v1123, %v1207
        %v1236 = vmul.f32 %v1124, %v1209
        %v1237 = vmul.f32 %v1125, %v1211
        %v1238 = vmul.f32 %v1126, %v1213
        %v1239 = vmul.f32 %v1127, %v1215
        %v1240 = vmul.f32 %v1128, %v1217
        %v1241 = vmul.f32 %v1129, %v1219
        %v1242 = vmul.f32 %v1130, %v1221
        %v1243 = vmul.f32 %v1131, %v1223
        %v1244 = vmul.f32 %v1132, %v1225
        %v1245 = vmul.f32 %v1133, %v1227
        %v1246 = vmul.f32 %v1134, %v1229
        %v1247 = vmul.f32 %v1135, %v1231
        %v1248 = vld [vmem:[#allocation16] sm:$0xf]
        %v1249 = vld [vmem:[#allocation16 + $0x4] sm:$0xf]
        %v1250 = vld [vmem:[#allocation16 + $0x8] sm:$0xf]
        %v1251 = vld [vmem:[#allocation16 + $0xc] sm:$0xf]
        %v1252 = vld [vmem:[#allocation16 + $0x10] sm:$0xf]
        %v1253 = vld [vmem:[#allocation16 + $0x14] sm:$0xf]
        %v1254 = vld [vmem:[#allocation16 + $0x18] sm:$0xf]
        %v1255 = vld [vmem:[#allocation16 + $0x1c] sm:$0xf]
        %v1256 = vld [vmem:[#allocation16 + $0x20] sm:$0xf]
        %v1257 = vld [vmem:[#allocation16 + $0x24] sm:$0xf]
        %v1258 = vld [vmem:[#allocation16 + $0x28] sm:$0xf]
        %v1259 = vld [vmem:[#allocation16 + $0x2c] sm:$0xf]
        %v1260 = vld [vmem:[#allocation16 + $0x30] sm:$0xf]
        %v1261 = vld [vmem:[#allocation16 + $0x34] sm:$0xf]
        %v1262 = vld [vmem:[#allocation16 + $0x38] sm:$0xf]
        %v1263 = vld [vmem:[#allocation16 + $0x3c] sm:$0xf]
        %v1264 = vpack.c.bf16 %v1233, %v1232
        %v1265 = vpack.c.bf16 %v1235, %v1234
        %v1266 = vpack.c.bf16 %v1237, %v1236
        %v1267 = vpack.c.bf16 %v1239, %v1238
        %v1268 = vpack.c.bf16 %v1241, %v1240
        %v1269 = vpack.c.bf16 %v1243, %v1242
        %v1270 = vpack.c.bf16 %v1245, %v1244
        %v1271 = vpack.c.bf16 %v1247, %v1246
        %v1272 = vld [vmem:[%s9] sm:$0x1]
        %v1274 = vlaneseq
        %v1275 = vshrl.u32 %v1274, 7
        %v1276 = vsub.s32 0, %v1275
        %v1277 = vrot.slane %v1272, %v1276
        %v1295 = vunpack.c.l.b16 %v1248
        %v1296 = vunpack.c.l.b16 %v1249
        %v1297 = vunpack.c.l.b16 %v1250
        %v1298 = vunpack.c.l.b16 %v1251
        %v1299 = vunpack.c.l.b16 %v1252
        %v1300 = vunpack.c.l.b16 %v1253
        %v1301 = vunpack.c.l.b16 %v1254
        %v1302 = vunpack.c.l.b16 %v1255
        %v1303 = vunpack.c.l.b16 %v1256
        %v1304 = vunpack.c.l.b16 %v1257
        %v1305 = vunpack.c.l.b16 %v1258
        %v1306 = vunpack.c.l.b16 %v1259
        %v1307 = vunpack.c.l.b16 %v1260
        %v1308 = vunpack.c.l.b16 %v1261
        %v1309 = vunpack.c.l.b16 %v1262
        %v1310 = vunpack.c.l.b16 %v1263
        %v1311 = vpack.c.b16 %v1296, %v1295
        %v1312 = vpack.c.b16 %v1298, %v1297
        %v1313 = vpack.c.b16 %v1300, %v1299
        %v1314 = vpack.c.b16 %v1302, %v1301
        %v1315 = vpack.c.b16 %v1304, %v1303
        %v1316 = vpack.c.b16 %v1306, %v1305
        %v1317 = vpack.c.b16 %v1308, %v1307
        %v1318 = vpack.c.b16 %v1310, %v1309
        %1327 = vmatprep.subr.bf16.mxu0 0
        %1328 = vmatpush1.bf16.msra.mxu0 %v1318
        %1329 = vmatprep.subr.bf16.mxu0 0
        %1330 = vmatpush1.bf16.msra.mxu0 %v1317
        %1331 = vmatprep.subr.bf16.mxu0 0
        %1332 = vmatpush1.bf16.msra.mxu0 %v1316
        %1333 = vmatprep.subr.bf16.mxu0 0
        %1334 = vmatpush1.bf16.msra.mxu0 %v1315
        %1335 = vmatprep.subr.bf16.mxu0 0
        %1336 = vmatpush1.bf16.msra.mxu0 %v1314
        %1337 = vmatprep.subr.bf16.mxu0 0
        %1338 = vmatpush1.bf16.msra.mxu0 %v1313
        %1339 = vmatprep.subr.bf16.mxu0 0
        %1340 = vmatpush1.bf16.msra.mxu0 %v1312
        %1341 = vmatprep.subr.bf16.mxu0 0
        %1342 = vmatpush1.bf16.msra.mxu0 %v1311
        %1343 = vmatprep.subr.bf16.mxu0 0
        %1344 = vmatpush2.bf16.msra.mxu0 0
        %1345 = vmatprep.subr.bf16.mxu0 0
        %1346 = vmatpush2.bf16.msra.mxu0 0
        %1347 = vmatprep.subr.bf16.mxu0 0
        %1348 = vmatpush2.bf16.msra.mxu0 0
        %1349 = vmatprep.subr.bf16.mxu0 0
        %1350 = vmatpush2.bf16.msra.mxu0 0
        %1351 = vmatprep.subr.bf16.mxu0 0
        %1352 = vmatpush2.bf16.msra.mxu0 0
        %1353 = vmatprep.subr.bf16.mxu0 0
        %1354 = vmatpush2.bf16.msra.mxu0 0
        %1355 = vmatprep.subr.bf16.mxu0 0
        %1356 = vmatpush2.bf16.msra.mxu0 0
        %1357 = vmatprep.subr.bf16.mxu0 0
        %1358 = vmatpush2.bf16.msra.mxu0 0
        %1359 = vmatprep.mubr.bf16.mxu0 0
        %1360 = vmatmul.mubr.bf16.gmra.mxu0 %v1264
        %v1361 = vpop.f32.mrf.mxu0
        %v1362 = vadd.f32 %v1277, %v1361
        %v1363 = vpop.f32.mrf.mxu0
        %v1364 = vpop.f32.mrf.mxu0
        %v1365 = vadd.f32 %v1277, %v1364
        %v1366 = vpop.f32.mrf.mxu0
        %1367 = vmatprep.mubr.bf16.mxu0 0
        %1368 = vmatmul.mubr.bf16.gmra.mxu0 %v1265
        %v1369 = vpop.f32.mrf.mxu0
        %v1370 = vadd.f32 %v1277, %v1369
        %v1371 = vpop.f32.mrf.mxu0
        %v1372 = vpop.f32.mrf.mxu0
        %v1373 = vadd.f32 %v1277, %v1372
        %v1374 = vpop.f32.mrf.mxu0
        %1375 = vmatprep.mubr.bf16.mxu0 0
        %1376 = vmatmul.mubr.bf16.gmra.mxu0 %v1266
        %v1377 = vpop.f32.mrf.mxu0
        %v1378 = vadd.f32 %v1277, %v1377
        %v1379 = vpop.f32.mrf.mxu0
        %v1380 = vpop.f32.mrf.mxu0
        %v1381 = vadd.f32 %v1277, %v1380
        %v1382 = vpop.f32.mrf.mxu0
        %1383 = vmatprep.mubr.bf16.mxu0 0
        %1384 = vmatmul.mubr.bf16.gmra.mxu0 %v1267
        %v1385 = vpop.f32.mrf.mxu0
        %v1386 = vadd.f32 %v1277, %v1385
        %v1387 = vpop.f32.mrf.mxu0
        %v1388 = vpop.f32.mrf.mxu0
        %v1389 = vadd.f32 %v1277, %v1388
        %v1390 = vpop.f32.mrf.mxu0
        %1391 = vmatprep.mubr.bf16.mxu0 0
        %1392 = vmatmul.mubr.bf16.gmra.mxu0 %v1268
        %v1393 = vpop.f32.mrf.mxu0
        %v1394 = vadd.f32 %v1277, %v1393
        %v1395 = vpop.f32.mrf.mxu0
        %v1396 = vpop.f32.mrf.mxu0
        %v1397 = vadd.f32 %v1277, %v1396
        %v1398 = vpop.f32.mrf.mxu0
        %1399 = vmatprep.mubr.bf16.mxu0 0
        %1400 = vmatmul.mubr.bf16.gmra.mxu0 %v1269
        %v1401 = vpop.f32.mrf.mxu0
        %v1402 = vadd.f32 %v1277, %v1401
        %v1403 = vpop.f32.mrf.mxu0
        %v1404 = vpop.f32.mrf.mxu0
        %v1405 = vadd.f32 %v1277, %v1404
        %v1406 = vpop.f32.mrf.mxu0
        %1407 = vmatprep.mubr.bf16.mxu0 0
        %1408 = vmatmul.mubr.bf16.gmra.mxu0 %v1270
        %v1409 = vpop.f32.mrf.mxu0
        %v1410 = vadd.f32 %v1277, %v1409
        %v1411 = vpop.f32.mrf.mxu0
        %v1412 = vpop.f32.mrf.mxu0
        %v1413 = vadd.f32 %v1277, %v1412
        %v1414 = vpop.f32.mrf.mxu0
        %1415 = vmatprep.mubr.bf16.mxu0 0
        %1416 = vmatmul.mubr.bf16.gmra.mxu0 %v1271
        %v1417 = vpop.f32.mrf.mxu0
        %v1418 = vadd.f32 %v1277, %v1417
        %v1419 = vpop.f32.mrf.mxu0
        %v1420 = vpop.f32.mrf.mxu0
        %v1421 = vadd.f32 %v1277, %v1420
        %v1422 = vpop.f32.mrf.mxu0
        %1423 = vdwg.mxu0
        %v1424 = vld [vmem:[%s10] sm:$0x1]
        %v1425 = vld [vmem:[%s11] sm:$0x1]
        %1426 = vadd.xlane.f32.xlu0 %v1362
        %v1427 = vpop.xlane.xlu0 %1426
        %1428 = vadd.xlane.f32.xlu0 %v1365
        %v1429 = vpop.xlane.xlu0 %1428
        %1430 = vadd.xlane.f32.xlu0 %v1370
        %v1431 = vpop.xlane.xlu0 %1430
        %1432 = vadd.xlane.f32.xlu0 %v1373
        %v1433 = vpop.xlane.xlu0 %1432
        %1434 = vadd.xlane.f32.xlu0 %v1378
        %v1435 = vpop.xlane.xlu0 %1434
        %1436 = vadd.xlane.f32.xlu0 %v1381
        %v1437 = vpop.xlane.xlu0 %1436
        %1438 = vadd.xlane.f32.xlu0 %v1386
        %v1439 = vpop.xlane.xlu0 %1438
        %1440 = vadd.xlane.f32.xlu0 %v1389
        %v1441 = vpop.xlane.xlu0 %1440
        %1442 = vadd.xlane.f32.xlu0 %v1394
        %v1443 = vpop.xlane.xlu0 %1442
        %1444 = vadd.xlane.f32.xlu0 %v1397
        %v1445 = vpop.xlane.xlu0 %1444
        %1446 = vadd.xlane.f32.xlu0 %v1402
        %v1447 = vpop.xlane.xlu0 %1446
        %1448 = vadd.xlane.f32.xlu0 %v1405
        %v1449 = vpop.xlane.xlu0 %1448
        %1450 = vadd.xlane.f32.xlu0 %v1410
        %v1451 = vpop.xlane.xlu0 %1450
        %1452 = vadd.xlane.f32.xlu0 %v1413
        %v1453 = vpop.xlane.xlu0 %1452
        %1454 = vadd.xlane.f32.xlu0 %v1418
        %v1455 = vpop.xlane.xlu0 %1454
        %1456 = vadd.xlane.f32.xlu0 %v1421
        %v1457 = vpop.xlane.xlu0 %1456
        %v1458 = vrcp.pop 128.0
        %v1459 = vmul.f32 %v1427, %v1458
        %v1460 = vmul.f32 %v1429, %v1458
        %v1461 = vmul.f32 %v1431, %v1458
        %v1462 = vmul.f32 %v1433, %v1458
        %v1463 = vmul.f32 %v1435, %v1458
        %v1464 = vmul.f32 %v1437, %v1458
        %v1465 = vmul.f32 %v1439, %v1458
        %v1466 = vmul.f32 %v1441, %v1458
        %v1467 = vmul.f32 %v1443, %v1458
        %v1468 = vmul.f32 %v1445, %v1458
        %v1469 = vmul.f32 %v1447, %v1458
        %v1470 = vmul.f32 %v1449, %v1458
        %v1471 = vmul.f32 %v1451, %v1458
        %v1472 = vmul.f32 %v1453, %v1458
        %v1473 = vmul.f32 %v1455, %v1458
        %v1474 = vmul.f32 %v1457, %v1458
        %v1475 = vsub.f32 %v1362, %v1459
        %v1476 = vsub.f32 %v1365, %v1460
        %v1477 = vsub.f32 %v1370, %v1461
        %v1478 = vsub.f32 %v1373, %v1462
        %v1479 = vsub.f32 %v1378, %v1463
        %v1480 = vsub.f32 %v1381, %v1464
        %v1481 = vsub.f32 %v1386, %v1465
        %v1482 = vsub.f32 %v1389, %v1466
        %v1483 = vsub.f32 %v1394, %v1467
        %v1484 = vsub.f32 %v1397, %v1468
        %v1485 = vsub.f32 %v1402, %v1469
        %v1486 = vsub.f32 %v1405, %v1470
        %v1487 = vsub.f32 %v1410, %v1471
        %v1488 = vsub.f32 %v1413, %v1472
        %v1489 = vsub.f32 %v1418, %v1473
        %v1490 = vsub.f32 %v1421, %v1474
        %v1491 = vmul.f32 %v1475, %v1475
        %v1492 = vmul.f32 %v1476, %v1476
        %v1493 = vmul.f32 %v1477, %v1477
        %v1494 = vmul.f32 %v1478, %v1478
        %v1495 = vmul.f32 %v1479, %v1479
        %v1496 = vmul.f32 %v1480, %v1480
        %v1497 = vmul.f32 %v1481, %v1481
        %v1498 = vmul.f32 %v1482, %v1482
        %v1499 = vmul.f32 %v1483, %v1483
        %v1500 = vmul.f32 %v1484, %v1484
        %v1501 = vmul.f32 %v1485, %v1485
        %v1502 = vmul.f32 %v1486, %v1486
        %v1503 = vmul.f32 %v1487, %v1487
        %v1504 = vmul.f32 %v1488, %v1488
        %v1505 = vmul.f32 %v1489, %v1489
        %v1506 = vmul.f32 %v1490, %v1490
        %1507 = vadd.xlane.f32.xlu0 %v1491
        %v1508 = vpop.xlane.xlu0 %1507
        %1509 = vadd.xlane.f32.xlu0 %v1492
        %v1510 = vpop.xlane.xlu0 %1509
        %1511 = vadd.xlane.f32.xlu0 %v1493
        %v1512 = vpop.xlane.xlu0 %1511
        %1513 = vadd.xlane.f32.xlu0 %v1494
        %v1514 = vpop.xlane.xlu0 %1513
        %1515 = vadd.xlane.f32.xlu0 %v1495
        %v1516 = vpop.xlane.xlu0 %1515
        %1517 = vadd.xlane.f32.xlu0 %v1496
        %v1518 = vpop.xlane.xlu0 %1517
        %1519 = vadd.xlane.f32.xlu0 %v1497
        %v1520 = vpop.xlane.xlu0 %1519
        %1521 = vadd.xlane.f32.xlu0 %v1498
        %v1522 = vpop.xlane.xlu0 %1521
        %1523 = vadd.xlane.f32.xlu0 %v1499
        %v1524 = vpop.xlane.xlu0 %1523
        %1525 = vadd.xlane.f32.xlu0 %v1500
        %v1526 = vpop.xlane.xlu0 %1525
        %1527 = vadd.xlane.f32.xlu0 %v1501
        %v1528 = vpop.xlane.xlu0 %1527
        %1529 = vadd.xlane.f32.xlu0 %v1502
        %v1530 = vpop.xlane.xlu0 %1529
        %1531 = vadd.xlane.f32.xlu0 %v1503
        %v1532 = vpop.xlane.xlu0 %1531
        %1533 = vadd.xlane.f32.xlu0 %v1504
        %v1534 = vpop.xlane.xlu0 %1533
        %1535 = vadd.xlane.f32.xlu0 %v1505
        %v1536 = vpop.xlane.xlu0 %1535
        %1537 = vadd.xlane.f32.xlu0 %v1506
        %v1538 = vpop.xlane.xlu0 %1537
        %v1539 = vmul.f32 %v1508, %v1458
        %v1540 = vmul.f32 %v1510, %v1458
        %v1541 = vmul.f32 %v1512, %v1458
        %v1542 = vmul.f32 %v1514, %v1458
        %v1543 = vmul.f32 %v1516, %v1458
        %v1544 = vmul.f32 %v1518, %v1458
        %v1545 = vmul.f32 %v1520, %v1458
        %v1546 = vmul.f32 %v1522, %v1458
        %v1547 = vmul.f32 %v1524, %v1458
        %v1548 = vmul.f32 %v1526, %v1458
        %v1549 = vmul.f32 %v1528, %v1458
        %v1550 = vmul.f32 %v1530, %v1458
        %v1551 = vmul.f32 %v1532, %v1458
        %v1552 = vmul.f32 %v1534, %v1458
        %v1553 = vmul.f32 %v1536, %v1458
        %v1554 = vmul.f32 %v1538, %v1458
        %v1555 = vadd.f32 %v1539, 1e-05
        %v1556 = vadd.f32 %v1540, 1e-05
        %v1557 = vadd.f32 %v1541, 1e-05
        %v1558 = vadd.f32 %v1542, 1e-05
        %v1559 = vadd.f32 %v1543, 1e-05
        %v1560 = vadd.f32 %v1544, 1e-05
        %v1561 = vadd.f32 %v1545, 1e-05
        %v1562 = vadd.f32 %v1546, 1e-05
        %v1563 = vadd.f32 %v1547, 1e-05
        %v1564 = vadd.f32 %v1548, 1e-05
        %v1565 = vadd.f32 %v1549, 1e-05
        %v1566 = vadd.f32 %v1550, 1e-05
        %v1567 = vadd.f32 %v1551, 1e-05
        %v1568 = vadd.f32 %v1552, 1e-05
        %v1569 = vadd.f32 %v1553, 1e-05
        %v1570 = vadd.f32 %v1554, 1e-05
        %v1571 = vrsqrt.pop %v1555
        %v1572 = vrsqrt.pop %v1556
        %v1573 = vrsqrt.pop %v1557
        %v1574 = vrsqrt.pop %v1558
        %v1575 = vrsqrt.pop %v1559
        %v1576 = vrsqrt.pop %v1560
        %v1577 = vrsqrt.pop %v1561
        %v1578 = vrsqrt.pop %v1562
        %v1579 = vrsqrt.pop %v1563
        %v1580 = vrsqrt.pop %v1564
        %v1581 = vrsqrt.pop %v1565
        %v1582 = vrsqrt.pop %v1566
        %v1583 = vrsqrt.pop %v1567
        %v1584 = vrsqrt.pop %v1568
        %v1585 = vrsqrt.pop %v1569
        %v1586 = vrsqrt.pop %v1570
        %v1587 = vmul.f32 %v1475, %v1571
        %v1588 = vmul.f32 %v1476, %v1572
        %v1589 = vmul.f32 %v1477, %v1573
        %v1590 = vmul.f32 %v1478, %v1574
        %v1591 = vmul.f32 %v1479, %v1575
        %v1592 = vmul.f32 %v1480, %v1576
        %v1593 = vmul.f32 %v1481, %v1577
        %v1594 = vmul.f32 %v1482, %v1578
        %v1595 = vmul.f32 %v1483, %v1579
        %v1596 = vmul.f32 %v1484, %v1580
        %v1597 = vmul.f32 %v1485, %v1581
        %v1598 = vmul.f32 %v1486, %v1582
        %v1599 = vmul.f32 %v1487, %v1583
        %v1600 = vmul.f32 %v1488, %v1584
        %v1601 = vmul.f32 %v1489, %v1585
        %v1602 = vmul.f32 %v1490, %v1586
        %v1604 = vlaneseq
        %v1605 = vshrl.u32 %v1604, 7
        %v1606 = vsub.s32 0, %v1605
        %v1607 = vrot.slane %v1424, %v1606
        %v1609 = vmul.f32 %v1587, %v1607
        %v1610 = vmul.f32 %v1588, %v1607
        %v1611 = vmul.f32 %v1589, %v1607
        %v1612 = vmul.f32 %v1590, %v1607
        %v1613 = vmul.f32 %v1591, %v1607
        %v1614 = vmul.f32 %v1592, %v1607
        %v1615 = vmul.f32 %v1593, %v1607
        %v1616 = vmul.f32 %v1594, %v1607
        %v1617 = vmul.f32 %v1595, %v1607
        %v1618 = vmul.f32 %v1596, %v1607
        %v1619 = vmul.f32 %v1597, %v1607
        %v1620 = vmul.f32 %v1598, %v1607
        %v1621 = vmul.f32 %v1599, %v1607
        %v1622 = vmul.f32 %v1600, %v1607
        %v1623 = vmul.f32 %v1601, %v1607
        %v1624 = vmul.f32 %v1602, %v1607
        %v1626 = vlaneseq
        %v1627 = vshrl.u32 %v1626, 7
        %v1628 = vsub.s32 0, %v1627
        %v1629 = vrot.slane %v1425, %v1628
        %v1631 = vadd.f32 %v1609, %v1629
        %v1632 = vadd.f32 %v1610, %v1629
        %v1633 = vadd.f32 %v1611, %v1629
        %v1634 = vadd.f32 %v1612, %v1629
        %v1635 = vadd.f32 %v1613, %v1629
        %v1636 = vadd.f32 %v1614, %v1629
        %v1637 = vadd.f32 %v1615, %v1629
        %v1638 = vadd.f32 %v1616, %v1629
        %v1639 = vadd.f32 %v1617, %v1629
        %v1640 = vadd.f32 %v1618, %v1629
        %v1641 = vadd.f32 %v1619, %v1629
        %v1642 = vadd.f32 %v1620, %v1629
        %v1643 = vadd.f32 %v1621, %v1629
        %v1644 = vadd.f32 %v1622, %v1629
        %v1645 = vadd.f32 %v1623, %v1629
        %v1646 = vadd.f32 %v1624, %v1629
        %v1647 = vadd.f32 %v1631, %v574
        %v1648 = vadd.f32 %v1632, %v575
        %v1649 = vadd.f32 %v1633, %v576
        %v1650 = vadd.f32 %v1634, %v577
        %v1651 = vadd.f32 %v1635, %v578
        %v1652 = vadd.f32 %v1636, %v579
        %v1653 = vadd.f32 %v1637, %v580
        %v1654 = vadd.f32 %v1638, %v581
        %v1655 = vadd.f32 %v1639, %v582
        %v1656 = vadd.f32 %v1640, %v583
        %v1657 = vadd.f32 %v1641, %v584
        %v1658 = vadd.f32 %v1642, %v585
        %v1659 = vadd.f32 %v1643, %v586
        %v1660 = vadd.f32 %v1644, %v587
        %v1661 = vadd.f32 %v1645, %v588
        %v1662 = vadd.f32 %v1646, %v589
        %1663 = vst [vmem:[%s482] sm:$0xff] %v1647
        %1664 = vst [vmem:[%s482 + $0x8] sm:$0xff] %v1648
        %1665 = vst [vmem:[%s482 + $0x10] sm:$0xff] %v1649
        %1666 = vst [vmem:[%s482 + $0x18] sm:$0xff] %v1650
        %1667 = vst [vmem:[%s482 + $0x20] sm:$0xff] %v1651
        %1668 = vst [vmem:[%s482 + $0x28] sm:$0xff] %v1652
        %1669 = vst [vmem:[%s482 + $0x30] sm:$0xff] %v1653
        %1670 = vst [vmem:[%s482 + $0x38] sm:$0xff] %v1654
        %1671 = vst [vmem:[%s482 + $0x40] sm:$0xff] %v1655
        %1672 = vst [vmem:[%s482 + $0x48] sm:$0xff] %v1656
        %1673 = vst [vmem:[%s482 + $0x50] sm:$0xff] %v1657
        %1674 = vst [vmem:[%s482 + $0x58] sm:$0xff] %v1658
        %1675 = vst [vmem:[%s482 + $0x60] sm:$0xff] %v1659
        %1676 = vst [vmem:[%s482 + $0x68] sm:$0xff] %v1660
        %1677 = vst [vmem:[%s482 + $0x70] sm:$0xff] %v1661
        %1678 = vst [vmem:[%s482 + $0x78] sm:$0xff] %v1662
        loop: start=0, step=1, limit=128
        $region96: #{tpu_custom_call.1} parent=59 // loop_pre_header
          _
        $region97: #{tpu_custom_call.1} parent=59 // loop_header
          %s1680 = sphi 0, %s1684
          %p1681 = scmp.ge.s32.totalorder %s1680, 128
        $region98: #{tpu_custom_call.1} parent=59 // loop_header_branch
          %1683 = sbr.rel (%p1681) target = $region102
        $region99: #{tpu_custom_call.1} parent=59 // loop_body
          %s1685 = smul.u32 %s41, 128
          %s1686 = sadd.s32 %s1685, %s1680
          %s1687 = sld [smem:[#allocation6 + %s1686]]
          %p1688 = scmp.lt.s32.totalorder %s1686, 512
          // Predicated region
          $region103: #{tpu_custom_call.1} parent=99 // pred_check
            %p1689 = pneg %p1688
          $region104: #{tpu_custom_call.1} parent=99 // pred_check_branch
            %1691 = sbr.rel (%p1689) target = $region106
          $region105: #{tpu_custom_call.1} parent=99 // pred_region
            %s1692 = scalar_lea.vmem [#allocation19], %s1687
            %v1693 = vld [vmem:[%s1692] sm:$0x1]
            %s1694 = scalar_lea.vmem %s482, %s1680 [#allocation18]
            %v1695 = vld [vmem:[%s1694] sm:$0x1]
            %v1696 = vadd.f32 %v1693, %v1695
            %1697 = vst [vmem:[%s1692] sm:$0x1] %v1696
          $region106: #{tpu_custom_call.1} parent=99 // pred_fallthru
            _
        $region100: #{tpu_custom_call.1} parent=59 // loop_footer
          %s1684 = sadd.s32 1, %s1680
        $region101: #{tpu_custom_call.1} parent=59 // loop_footer_branch
          %1679 = sbr.rel target = $region97
        $region102: #{tpu_custom_call.1} parent=59 // loop_exit
          _
        %s1698 = sand.u32 %s264, 1
        %s1699 = scalar_lea.sflag [#allocation9], %s1698
        %s1700 = sand.u32 %s264, 1
        %s1701 = smul.addr %s1700, 128
        %s1702 = scalar_lea.vmem [#allocation18], %s1701
        // Predicated region
        $region107: #{tpu_custom_call.1} parent=59 // pred_check
          %p1703 = pneg %p274
        $region108: #{tpu_custom_call.1} parent=59 // pred_check_branch
          %1705 = sbr.rel (%p1703) target = $region110
        $region109: #{tpu_custom_call.1} parent=59 // pred_region
          %s1706 = smul.u32 16, %s41
          %s1708 = ssub.s32 2048, 2048
          %1709 = vsyncadd %s1699, %s1708
          %s1710 = smul.addr %s1706, 128
          %s1711 = scalar_lea.hbm %s12, %s1710
          %s1712 = sshll.u32 %s1702, 4
          %s1713 = int_to_ptr.vmem [resolvable:$true] %s1712
          %1718 = dma.vmem_to_hbm [thread:$0]  %s1713, 2048, %s1711, %s1699, 128, 128, 8
        $region110: #{tpu_custom_call.1} parent=59 // pred_fallthru
          _
        // Predicated region
        $region111: #{tpu_custom_call.1} parent=59 // pred_check
          %p1719 = pneg %p295
        $region112: #{tpu_custom_call.1} parent=59 // pred_check_branch
          %1721 = sbr.rel (%p1719) target = $region114
        $region113: #{tpu_custom_call.1} parent=59 // pred_region
          %s1723 = ssub.s32 4096, 4096
          %1724 = vsyncadd [#allocation20], %s1723
          %s1725 = sshll.u32 [#allocation19], 4
          %s1726 = int_to_ptr.vmem [resolvable:$true] %s1725
          %1731 = dma.vmem_to_hbm [thread:$0]  %s1726, 4096, %s13, [#allocation20], 128, 128, 8
        $region114: #{tpu_custom_call.1} parent=59 // pred_fallthru
          _
        // Predicated region
        $region115: #{tpu_custom_call.1} parent=59 // pred_check
          %p1732 = pneg %p295
        $region116: #{tpu_custom_call.1} parent=59 // pred_check_branch
          %1734 = sbr.rel (%p1732) target = $region118
        $region117: #{tpu_custom_call.1} parent=59 // pred_region
          %1735 = dma.done [#allocation20], 4096
        $region118: #{tpu_custom_call.1} parent=59 // pred_fallthru
          _
      $region60: #{tpu_custom_call.1} parent=5 // pred_fallthru
        _
      %p1736 = scmp.le.s32.totalorder 2, %s36
      // Predicated region
      $region119: #{tpu_custom_call.1} parent=5 // pred_check
        %p1737 = pneg %p1736
      $region120: #{tpu_custom_call.1} parent=5 // pred_check_branch
        %1739 = sbr.rel (%p1737) target = $region122
      $region121: #{tpu_custom_call.1} parent=5 // pred_region
        %s1740 = ssub.s32 %s36, 2
        // Predicated region
        $region123: #{tpu_custom_call.1} parent=121 // pred_check
          %p1741 = pneg %p280
        $region124: #{tpu_custom_call.1} parent=121 // pred_check_branch
          %1743 = sbr.rel (%p1741) target = $region126
        $region125: #{tpu_custom_call.1} parent=121 // pred_region
          %s1744 = sand.u32 %s265, 1
          %s1745 = scalar_lea.sflag [#allocation9], %s1744
          %s1746 = sand.u32 %s265, 1
          %s1747 = smul.addr %s1746, 128
          %s1748 = scalar_lea.vmem [#allocation18], %s1747
          %1749 = dma.done %s1745, 2048
        $region126: #{tpu_custom_call.1} parent=121 // pred_fallthru
          _
      $region122: #{tpu_custom_call.1} parent=5 // pred_fallthru
        _
    $region6: #{tpu_custom_call.1} parent=1 // loop_footer
      %s40 = sadd.s32 1, %s36
    $region7: #{tpu_custom_call.1} parent=1 // loop_footer_branch
      %35 = sbr.rel target = $region3
    $region8: #{tpu_custom_call.1} parent=1 // loop_exit
      _
    %1750 = vsyncpa [#allocation8], 1
    %s1751 = scalar_lea.sflag [#allocation8], 1
    %1752 = vsyncpa %s1751, 1
    %1753 = vsyncpa [#allocation11], 1
    %s1754 = scalar_lea.sflag [#allocation11], 1
    %1755 = vsyncpa %s1754, 1
    %1756 = vsyncpa [#allocation14], 1
    %1757 = vsyncpa [#allocation17], 1
    %1758 = vsyncpa [#allocation9], 1
    %s1759 = scalar_lea.sflag [#allocation9], 1
    %1760 = vsyncpa %s1759, 1
    %1761 = vsyncpa [#allocation20], 1

</llo_original>
